<compile_context>
chip_gen: v5e
topology: v5e:2x2
jax: 0.10.0
libtpu: 0.0.40
codegen_flags: <defaults>
</compile_context>

<pallas_src>
import functools

import jax
import jax.numpy as jnp
from jax import lax
from jax.experimental import pallas as pl
from jax.experimental.pallas import tpu as pltpu

EPS = 1e-5  # nn.InstanceNorm2d default


def _resnet_block_kernel(x_ref, w1_ref, b1_ref, w2_ref, b2_ref, o_ref, *,
                         width, nb, per_tap, compute_dtype):
    # x_ref / o_ref : (nb, C, P) with P = H*W  -- nb batch elements per step
    # w*_ref        : (C, 9C) im2col weight (fused path) or (9, C, C) per-tap
    # b*_ref        : (C, 1) conv bias (f32)
    C = x_ref.shape[1]
    P = x_ref.shape[2]
    W = width
    inv_p = 1.0 / P

    # Weights / biases loaded (and already in compute dtype) once per grid
    # step; reused across all nb batch elements.
    w1 = w1_ref[...]
    w2 = w2_ref[...]
    b1 = b1_ref[...].astype(jnp.float32)          # (C,1) broadcasts over lanes
    b2 = b2_ref[...].astype(jnp.float32)

    # (1, P) border masks over the flattened spatial (lane) axis; broadcast
    # inside the selects (no materialized (C, P) masks).
    lane = lax.broadcasted_iota(jnp.int32, (1, P), 1)
    col = lane % W
    first_col = col == 0
    last_col = col == W - 1
    first_row = lane < W
    last_row = lane >= P - W

    def col_tap(a, kx):
        # Shifted view along the W (column) axis with reflection at j=0 / W-1.
        if kx == 1:
            return a
        left = pltpu.roll(a, shift=1, axis=1)       # a[i, j-1] (wraps at j==0)
        right = pltpu.roll(a, shift=P - 1, axis=1)  # a[i, j+1] (wraps at j==W-1)
        if kx == 0:                                 # dx = -1 : j==0   -> a[i, 1]
            return jnp.where(first_col, right, left)
        return jnp.where(last_col, left, right)     # dx = +1 : j==W-1 -> a[i, W-2]

    def row_tap(a, ky):
        # Shifted view along the H (row) axis with reflection at i=0 / H-1.
        if ky == 1:
            return a
        down = pltpu.roll(a, shift=W, axis=1)       # a[i-1, :] (wraps at i==0)
        up = pltpu.roll(a, shift=P - W, axis=1)     # a[i+1, :] (wraps at i==H-1)
        if ky == 0:                                 # dy = -1 : i==0   -> row 1
            return jnp.where(first_row, up, down)
        return jnp.where(last_row, down, up)        # dy = +1 : i==H-1 -> row H-2

    def conv3x3(a, w, b):
        # ReflectionPad2d(1) + Conv2d(3x3); MXU operands in compute_dtype,
        # f32 accumulation.
        cols = tuple(col_tap(a, kx) for kx in range(3))   # 3 live (C, P) tiles
        if per_tap:
            # Large-C / v7x path: 9 accumulated (C,C)@(C,P) matmuls, one tap
            # live at a time -- no (9C, P) im2col buffer, minimal vector stores.
            acc = jnp.zeros((C, P), jnp.float32)
            for ky in range(3):
                for kx in range(3):
                    tap = row_tap(cols[kx], ky).astype(compute_dtype)
                    acc = acc + jnp.dot(w[ky * 3 + kx], tap,
                                        preferred_element_type=jnp.float32)
            return acc + b
        # Small-C path: one (C,9C)@(9C,P) matmul (keeps the MXU K dim useful).
        taps = [row_tap(cols[kx], ky).astype(compute_dtype)
                for ky in range(3) for kx in range(3)]
        patches = jnp.concatenate(taps, axis=0)            # (9C, P)
        return jnp.dot(w, patches, preferred_element_type=jnp.float32) + b

    def instance_norm(a):
        # One pass: sum + sum-of-squares (f32), biased variance, no affine
        # (nn.InstanceNorm2d defaults).  Clamp var >= 0 against cancellation.
        s = jnp.sum(a, axis=1, keepdims=True)
        ss = jnp.sum(a * a, axis=1, keepdims=True)
        mu = s * inv_p
        var = jnp.maximum(ss * inv_p - mu * mu, 0.0)
        return (a - mu) * lax.rsqrt(var + EPS)

    # nb is small & static: the loop amortizes per-grid-step overhead and
    # reuses the hoisted masks / weights across batch elements.
    for i in range(nb):
        x = x_ref[i].astype(jnp.float32)            # (C, P)
        y = conv3x3(x, w1, b1)
        y = instance_norm(y)
        y = jnp.maximum(y, 0.0)                     # ReLU
        # TODO(synk): train-mode Dropout(p=0.5) not implemented; this kernel
        # matches the use_dropout=False / eval path of the PyTorch module.
        y = conv3x3(y, w2, b2)
        y = instance_norm(y)
        o_ref[i] = (x + y).astype(o_ref.dtype)      # skip connection


def _pick_batch_per_step(N, C, P, itemsize):
    # Cap the (nb, C, P) in/out blocks (double-buffered) to a few MiB.
    cap = max(1, (4 << 20) // max(1, C * P * itemsize))
    # Keep >= 2 grid steps so both v7x TensorCores get work (megacore).
    nb = min(cap, max(1, N // 2)) if N >= 2 else 1
    # Require nb | N so every block is full (no partial edge blocks).
    while N % nb:
        nb -= 1
    return nb


def _vmem_limit_bytes(nb, C, P, per_tap, x_itemsize, compute_itemsize):
    io = 2 * 2 * nb * C * P * x_itemsize                    # dbl-buffered in+out
    wgt = 2 * 9 * C * C * compute_itemsize + 2 * C * 4      # weights + biases
    live = 8 * C * P * 4                                     # f32 temporaries
    if not per_tap:
        live += 9 * C * P * compute_itemsize                 # im2col patches
    need = io + wgt + live + (4 << 20)                       # compiler headroom
    return int(min(max(need, 32 << 20), 56 << 20))           # <=56 MiB: v7x-safe


def resnet_block_nchw(x_nchw, w1_oihw, b1, w2_oihw, b2, *,
                      compute_dtype=jnp.bfloat16, single_buffer_weights=True):
    """Matches PyTorch ResnetBlock.forward (use_dropout=False) on NCHW input."""
    N, C, H, W = x_nchw.shape
    P = H * W
    assert H >= 2 and W >= 2, "ReflectionPad2d(1) requires H, W >= 2"
    assert P % 128 == 0, "H*W must be a multiple of 128 for lane-dense tiling"

    per_tap = C >= 64        # review: fused im2col only for small C

    # Free reshape only on the activation path — no HBM transpose.
    x2 = x_nchw.reshape(N, C, P)

    if per_tap:
        # Per-tap layout (9, Cout, Cin): w[k] with k = ky*3 + kx.
        w1_k = jnp.transpose(w1_oihw, (2, 3, 0, 1)).reshape(9, C, C).astype(compute_dtype)
        w2_k = jnp.transpose(w2_oihw, (2, 3, 0, 1)).reshape(9, C, C).astype(compute_dtype)
        w_block, w_index = (9, C, C), (lambda n: (0, 0, 0))
    else:
        # Fused im2col layout (Cout, 9*Cin), column order (ky, kx, ci).
        w1_k = jnp.transpose(w1_oihw, (0, 2, 3, 1)).reshape(C, 9 * C).astype(compute_dtype)
        w2_k = jnp.transpose(w2_oihw, (0, 2, 3, 1)).reshape(C, 9 * C).astype(compute_dtype)
        w_block, w_index = (C, 9 * C), (lambda n: (0, 0))
    b1_2d = b1.reshape(C, 1).astype(jnp.float32)
    b2_2d = b2.reshape(C, 1).astype(jnp.float32)

    x_itemsize = jnp.dtype(x_nchw.dtype).itemsize
    c_itemsize = jnp.dtype(compute_dtype).itemsize
    nb = _pick_batch_per_step(N, C, P, x_itemsize)
    grid = (N // nb,)

    kernel = functools.partial(_resnet_block_kernel, width=W, nb=nb,
                               per_tap=per_tap, compute_dtype=compute_dtype)

    # Constant-index operands never need re-fetching; single-buffer them to
    # reclaim VMEM headroom (matters for large C on v7x).
    wkw = dict(pipeline_mode=pl.Buffered(buffer_count=1)) if single_buffer_weights else {}
    weight_spec = pl.BlockSpec(w_block, w_index, **wkw)
    bias_spec = pl.BlockSpec((C, 1), lambda n: (0, 0), **wkw)

    cost = pl.CostEstimate(
        flops=4 * 9 * C * C * P * N,                 # two 3x3 convs
        transcendentals=2 * C * N,                   # rsqrt in the InstanceNorms
        bytes_accessed=2 * N * C * P * x_itemsize + 2 * (9 * C * C + C) * c_itemsize,
    )

    # NOTE: whole-image (C, P) tiles per batch element.  For very large C*H*W
    # (v7x 64 MiB VMEM) this would additionally need a row-block grid axis with
    # a 1-row halo and a two-pass InstanceNorm.
    out = pl.pallas_call(
        kernel,
        out_shape=jax.ShapeDtypeStruct((N, C, P), x_nchw.dtype),
        grid_spec=pltpu.PrefetchScalarGridSpec(
            num_scalar_prefetch=0,
            grid=grid,
            in_specs=[
                pl.BlockSpec((nb, C, P), lambda n: (n, 0, 0)),
                weight_spec,
                bias_spec,
                weight_spec,
                bias_spec,
            ],
            out_specs=pl.BlockSpec((nb, C, P), lambda n: (n, 0, 0)),
        ),
        compiler_params=pltpu.CompilerParams(
            dimension_semantics=("parallel",),
            vmem_limit_bytes=_vmem_limit_bytes(nb, C, P, per_tap,
                                               x_itemsize, c_itemsize)),
        cost_estimate=cost,
    )(x2, w1_k, b1_2d, w2_k, b2_2d)
    return out.reshape(N, C, H, W)


# ----------------------- pure-JAX reference (sanity check) -------------------
def _reference_nchw(x, w1, b1, w2, b2):
    def refl_pad(a):  # NCHW, pad=1 on H, W
        return jnp.pad(a, ((0, 0), (0, 0), (1, 1), (1, 1)), mode="reflect")

    def conv(a, w, b):
        y = lax.conv_general_dilated(a, w, (1, 1), "VALID",
                                     dimension_numbers=("NCHW", "OIHW", "NCHW"),
                                     precision=lax.Precision.HIGHEST)
        return y + b.reshape(1, -1, 1, 1)

    def inorm(a):
        mu = jnp.mean(a, axis=(2, 3), keepdims=True)
        var = jnp.mean((a - mu) ** 2, axis=(2, 3), keepdims=True)
        return (a - mu) * lax.rsqrt(var + EPS)

    y = jnp.maximum(inorm(conv(refl_pad(x), w1, b1)), 0.0)
    y = inorm(conv(refl_pad(y), w2, b2))
    return x + y


if __name__ == "__main__":
    # dim (channels) = 4, batch = 2, spatial = 16x16, use_dropout = False
    N, C, H, W = 2, 4, 16, 16
    key = jax.random.PRNGKey(0)
    kx, kw1, kb1, kw2, kb2 = jax.random.split(key, 5)

    x = jax.random.normal(kx, (N, C, H, W), dtype=jnp.float32)
    # deterministic "init": uniform in [-bound, bound], bound = 1/sqrt(C*3*3)
    bound = 1.0 / (C * 3 * 3) ** 0.5
    w1 = jax.random.uniform(kw1, (C, C, 3, 3), jnp.float32, -bound, bound)
    b1 = jax.random.uniform(kb1, (C,), jnp.float32, -bound, bound)
    w2 = jax.random.uniform(kw2, (C, C, 3, 3), jnp.float32, -bound, bound)
    b2 = jax.random.uniform(kb2, (C,), jnp.float32, -bound, bound)

    ref = _reference_nchw(x, w1, b1, w2, b2)

    def run(**kw):
        fn = jax.jit(functools.partial(resnet_block_nchw, **kw))
        return jax.block_until_ready(fn(x, w1, b1, w2, b2))

    single_buf = True
    try:
        out = run(compute_dtype=jnp.bfloat16, single_buffer_weights=True)
    except Exception:
        # Fallback if this JAX build rejects pl.Buffered(1) single-buffering.
        single_buf = False
        out = run(compute_dtype=jnp.bfloat16, single_buffer_weights=False)

    assert out.shape == (N, C, H, W)
    # bf16 MXU operands (f32 accumulation): loose tolerance vs. f32 reference.
    assert jnp.allclose(out, ref, atol=6e-2, rtol=6e-2), "bf16 path mismatch"

    # Exact-math path: tight tolerance confirms the reflection / conv /
    # InstanceNorm / skip semantics.
    out_f32 = run(compute_dtype=jnp.float32, single_buffer_weights=single_buf)
    assert jnp.allclose(out_f32, ref, atol=2e-3, rtol=2e-3), "f32 path mismatch"

    print("KERNEL_OK")
</pallas_src>

<mosaic_0001>
module attributes {stable_mosaic.version = 11 : i64} {
  func.func @_resnet_block_kernel(%arg0: i32, %arg1: memref<1x4x256xf32, #tpu.memory_space<vmem>>, %arg2: memref<4x36xbf16, #tpu.memory_space<vmem>>, %arg3: memref<4x1xf32, #tpu.memory_space<vmem>>, %arg4: memref<4x36xbf16, #tpu.memory_space<vmem>>, %arg5: memref<4x1xf32, #tpu.memory_space<vmem>>, %arg6: memref<1x4x256xf32, #tpu.memory_space<vmem>>) attributes {dimension_semantics = [#tpu.dimension_semantics<parallel>], iteration_bounds = array<i64: 2>, scalar_prefetch = 0 : i64, scratch_operands = 0 : i64, tpu.core_type = #tpu.core_type<tc>, window_params = [{transform_indices = @transform_0, window_bounds = array<i64: 1, 4, 256>}, {pipeline_mode = #tpu.pipeline_mode<synchronous>, transform_indices = @transform_1, window_bounds = array<i64: 4, 36>}, {pipeline_mode = #tpu.pipeline_mode<synchronous>, transform_indices = @transform_2, window_bounds = array<i64: 4, 1>}, {pipeline_mode = #tpu.pipeline_mode<synchronous>, transform_indices = @transform_3, window_bounds = array<i64: 4, 36>}, {pipeline_mode = #tpu.pipeline_mode<synchronous>, transform_indices = @transform_4, window_bounds = array<i64: 4, 1>}, {transform_indices = @transform_5, window_bounds = array<i64: 1, 4, 256>}]} {
    %c0 = arith.constant 0 : index
    %c0_0 = arith.constant 0 : index
    %0 = vector.load %arg2[%c0, %c0_0] : memref<4x36xbf16, #tpu.memory_space<vmem>>, vector<4x36xbf16>
    %c0_1 = arith.constant 0 : index
    %c0_2 = arith.constant 0 : index
    %1 = vector.load %arg4[%c0_1, %c0_2] : memref<4x36xbf16, #tpu.memory_space<vmem>>, vector<4x36xbf16>
    %c0_3 = arith.constant 0 : index
    %c0_4 = arith.constant 0 : index
    %2 = vector.load %arg3[%c0_3, %c0_4] : memref<4x1xf32, #tpu.memory_space<vmem>>, vector<4x1xf32>
    %c0_5 = arith.constant 0 : index
    %c0_6 = arith.constant 0 : index
    %3 = vector.load %arg5[%c0_5, %c0_6] : memref<4x1xf32, #tpu.memory_space<vmem>>, vector<4x1xf32>
    %4 = tpu.iota {dimensions = array<i32: 1>} : vector<1x256xi32>
    %c16_i32 = arith.constant 16 : i32
    %c0_i32 = arith.constant 0 : i32
    %5 = arith.cmpi eq, %c16_i32, %c0_i32 : i32
    %c1_i32 = arith.constant 1 : i32
    %6 = arith.select %5, %c1_i32, %c16_i32 : i32
    %7 = vector.broadcast %6 : i32 to vector<1x256xi32>
    %8 = arith.remsi %4, %7 : vector<1x256xi32>
    %c0_i32_7 = arith.constant 0 : i32
    %9 = vector.broadcast %c0_i32_7 : i32 to vector<1x256xi32>
    %10 = arith.cmpi ne, %8, %9 : vector<1x256xi32>
    %c0_i32_8 = arith.constant 0 : i32
    %11 = vector.broadcast %c0_i32_8 : i32 to vector<1x256xi32>
    %12 = arith.cmpi slt, %8, %11 : vector<1x256xi32>
    %c0_i32_9 = arith.constant 0 : i32
    %13 = arith.cmpi slt, %6, %c0_i32_9 : i32
    %14 = vector.broadcast %13 : i1 to vector<1x256xi1>
    %15 = vector.broadcast %14 : vector<1x256xi1> to vector<1x256xi1>
    %16 = arith.xori %12, %15 : vector<1x256xi1>
    %17 = arith.andi %16, %10 : vector<1x256xi1>
    %18 = vector.broadcast %6 : i32 to vector<1x256xi32>
    %19 = arith.addi %8, %18 : vector<1x256xi32>
    %20 = arith.select %17, %19, %8 : vector<1x256xi1>, vector<1x256xi32>
    %c0_i32_10 = arith.constant 0 : i32
    %21 = vector.broadcast %c0_i32_10 : i32 to vector<1x256xi32>
    %22 = arith.cmpi eq, %20, %21 : vector<1x256xi32>
    %c15_i32 = arith.constant 15 : i32
    %23 = vector.broadcast %c15_i32 : i32 to vector<1x256xi32>
    %24 = arith.cmpi eq, %20, %23 : vector<1x256xi32>
    %c16_i32_11 = arith.constant 16 : i32
    %25 = vector.broadcast %c16_i32_11 : i32 to vector<1x256xi32>
    %26 = arith.cmpi slt, %4, %25 : vector<1x256xi32>
    %c240_i32 = arith.constant 240 : i32
    %27 = vector.broadcast %c240_i32 : i32 to vector<1x256xi32>
    %28 = arith.cmpi sge, %4, %27 : vector<1x256xi32>
    %c0_12 = arith.constant 0 : index
    %c0_13 = arith.constant 0 : index
    %c0_14 = arith.constant 0 : index
    %29 = vector.load %arg1[%c0_12, %c0_13, %c0_14] : memref<1x4x256xf32, #tpu.memory_space<vmem>>, vector<1x4x256xf32>
    %30 = vector.shape_cast %29 : vector<1x4x256xf32> to vector<4x256xf32>
    %c1_i32_15 = arith.constant 1 : i32
    %31 = tpu.dynamic_rotate %30 by %c1_i32_15 dim 1 : vector<4x256xf32>, i32 -> vector<4x256xf32>
    %c255_i32 = arith.constant 255 : i32
    %32 = tpu.dynamic_rotate %30 by %c255_i32 dim 1 : vector<4x256xf32>, i32 -> vector<4x256xf32>
    %33 = vector.shape_cast %22 : vector<1x256xi1> to vector<1x256xi1>
    %34 = vector.broadcast %33 : vector<1x256xi1> to vector<4x256xi1>
    %35 = arith.select %34, %32, %31 : vector<4x256xi1>, vector<4x256xf32>
    %c1_i32_16 = arith.constant 1 : i32
    %36 = tpu.dynamic_rotate %30 by %c1_i32_16 dim 1 : vector<4x256xf32>, i32 -> vector<4x256xf32>
    %c255_i32_17 = arith.constant 255 : i32
    %37 = tpu.dynamic_rotate %30 by %c255_i32_17 dim 1 : vector<4x256xf32>, i32 -> vector<4x256xf32>
    %38 = vector.shape_cast %24 : vector<1x256xi1> to vector<1x256xi1>
    %39 = vector.broadcast %38 : vector<1x256xi1> to vector<4x256xi1>
    %40 = arith.select %39, %36, %37 : vector<4x256xi1>, vector<4x256xf32>
    %c16_i32_18 = arith.constant 16 : i32
    %41 = tpu.dynamic_rotate %35 by %c16_i32_18 dim 1 : vector<4x256xf32>, i32 -> vector<4x256xf32>
    %c240_i32_19 = arith.constant 240 : i32
    %42 = tpu.dynamic_rotate %35 by %c240_i32_19 dim 1 : vector<4x256xf32>, i32 -> vector<4x256xf32>
    %43 = vector.shape_cast %26 : vector<1x256xi1> to vector<1x256xi1>
    %44 = vector.broadcast %43 : vector<1x256xi1> to vector<4x256xi1>
    %45 = arith.select %44, %42, %41 : vector<4x256xi1>, vector<4x256xf32>
    %46 = arith.truncf %45 : vector<4x256xf32> to vector<4x256xbf16>
    %c16_i32_20 = arith.constant 16 : i32
    %47 = tpu.dynamic_rotate %30 by %c16_i32_20 dim 1 : vector<4x256xf32>, i32 -> vector<4x256xf32>
    %c240_i32_21 = arith.constant 240 : i32
    %48 = tpu.dynamic_rotate %30 by %c240_i32_21 dim 1 : vector<4x256xf32>, i32 -> vector<4x256xf32>
    %49 = vector.shape_cast %26 : vector<1x256xi1> to vector<1x256xi1>
    %50 = vector.broadcast %49 : vector<1x256xi1> to vector<4x256xi1>
    %51 = arith.select %50, %48, %47 : vector<4x256xi1>, vector<4x256xf32>
    %52 = arith.truncf %51 : vector<4x256xf32> to vector<4x256xbf16>
    %c16_i32_22 = arith.constant 16 : i32
    %53 = tpu.dynamic_rotate %40 by %c16_i32_22 dim 1 : vector<4x256xf32>, i32 -> vector<4x256xf32>
    %c240_i32_23 = arith.constant 240 : i32
    %54 = tpu.dynamic_rotate %40 by %c240_i32_23 dim 1 : vector<4x256xf32>, i32 -> vector<4x256xf32>
    %55 = vector.shape_cast %26 : vector<1x256xi1> to vector<1x256xi1>
    %56 = vector.broadcast %55 : vector<1x256xi1> to vector<4x256xi1>
    %57 = arith.select %56, %54, %53 : vector<4x256xi1>, vector<4x256xf32>
    %58 = arith.truncf %57 : vector<4x256xf32> to vector<4x256xbf16>
    %59 = arith.truncf %35 : vector<4x256xf32> to vector<4x256xbf16>
    %60 = arith.truncf %30 : vector<4x256xf32> to vector<4x256xbf16>
    %61 = arith.truncf %40 : vector<4x256xf32> to vector<4x256xbf16>
    %c16_i32_24 = arith.constant 16 : i32
    %62 = tpu.dynamic_rotate %35 by %c16_i32_24 dim 1 : vector<4x256xf32>, i32 -> vector<4x256xf32>
    %c240_i32_25 = arith.constant 240 : i32
    %63 = tpu.dynamic_rotate %35 by %c240_i32_25 dim 1 : vector<4x256xf32>, i32 -> vector<4x256xf32>
    %64 = vector.shape_cast %28 : vector<1x256xi1> to vector<1x256xi1>
    %65 = vector.broadcast %64 : vector<1x256xi1> to vector<4x256xi1>
    %66 = arith.select %65, %62, %63 : vector<4x256xi1>, vector<4x256xf32>
    %67 = arith.truncf %66 : vector<4x256xf32> to vector<4x256xbf16>
    %c16_i32_26 = arith.constant 16 : i32
    %68 = tpu.dynamic_rotate %30 by %c16_i32_26 dim 1 : vector<4x256xf32>, i32 -> vector<4x256xf32>
    %c240_i32_27 = arith.constant 240 : i32
    %69 = tpu.dynamic_rotate %30 by %c240_i32_27 dim 1 : vector<4x256xf32>, i32 -> vector<4x256xf32>
    %70 = vector.shape_cast %28 : vector<1x256xi1> to vector<1x256xi1>
    %71 = vector.broadcast %70 : vector<1x256xi1> to vector<4x256xi1>
    %72 = arith.select %71, %68, %69 : vector<4x256xi1>, vector<4x256xf32>
    %73 = arith.truncf %72 : vector<4x256xf32> to vector<4x256xbf16>
    %c16_i32_28 = arith.constant 16 : i32
    %74 = tpu.dynamic_rotate %40 by %c16_i32_28 dim 1 : vector<4x256xf32>, i32 -> vector<4x256xf32>
    %c240_i32_29 = arith.constant 240 : i32
    %75 = tpu.dynamic_rotate %40 by %c240_i32_29 dim 1 : vector<4x256xf32>, i32 -> vector<4x256xf32>
    %76 = vector.shape_cast %28 : vector<1x256xi1> to vector<1x256xi1>
    %77 = vector.broadcast %76 : vector<1x256xi1> to vector<4x256xi1>
    %78 = arith.select %77, %74, %75 : vector<4x256xi1>, vector<4x256xf32>
    %79 = arith.truncf %78 : vector<4x256xf32> to vector<4x256xbf16>
    %80 = tpu.concatenate %46, %52, %58, %59, %60, %61, %67, %73, %79 in 0 : vector<4x256xbf16>, vector<4x256xbf16>, vector<4x256xbf16>, vector<4x256xbf16>, vector<4x256xbf16>, vector<4x256xbf16>, vector<4x256xbf16>, vector<4x256xbf16>, vector<4x256xbf16> -> vector<36x256xbf16>
    %cst = arith.constant dense<0.000000e+00> : vector<4x256xf32>
    %81 = tpu.matmul %0, %80, %cst {dimension_numbers = #tpu.dot_dimension_numbers<[1], [0], [0], [1], [0, 0, 1, 1], [], []>} : vector<4x36xbf16>, vector<36x256xbf16>, vector<4x256xf32> -> vector<4x256xf32>
    %82 = vector.broadcast %2 : vector<4x1xf32> to vector<4x256xf32>
    %83 = arith.addf %81, %82 : vector<4x256xf32>
    %cst_30 = arith.constant dense<0.000000e+00> : vector<4xf32>
    %84 = vector.multi_reduction <add>, %83, %cst_30 [1] : vector<4x256xf32> to vector<4xf32>
    %85 = vector.shape_cast %84 : vector<4xf32> to vector<4x1xf32>
    %86 = arith.mulf %83, %83 : vector<4x256xf32>
    %cst_31 = arith.constant dense<0.000000e+00> : vector<4xf32>
    %87 = vector.multi_reduction <add>, %86, %cst_31 [1] : vector<4x256xf32> to vector<4xf32>
    %88 = vector.shape_cast %87 : vector<4xf32> to vector<4x1xf32>
    %cst_32 = arith.constant 3.906250e-03 : f32
    %89 = vector.broadcast %cst_32 : f32 to vector<4x1xf32>
    %90 = arith.mulf %85, %89 : vector<4x1xf32>
    %cst_33 = arith.constant 3.906250e-03 : f32
    %91 = vector.broadcast %cst_33 : f32 to vector<4x1xf32>
    %92 = arith.mulf %88, %91 : vector<4x1xf32>
    %93 = arith.mulf %90, %90 : vector<4x1xf32>
    %94 = arith.subf %92, %93 : vector<4x1xf32>
    %cst_34 = arith.constant 0.000000e+00 : f32
    %95 = vector.broadcast %cst_34 : f32 to vector<4x1xf32>
    %96 = arith.maximumf %94, %95 : vector<4x1xf32>
    %97 = vector.broadcast %90 : vector<4x1xf32> to vector<4x256xf32>
    %98 = arith.subf %83, %97 : vector<4x256xf32>
    %cst_35 = arith.constant 9.99999974E-6 : f32
    %99 = vector.broadcast %cst_35 : f32 to vector<4x1xf32>
    %100 = arith.addf %96, %99 : vector<4x1xf32>
    %101 = math.rsqrt %100 : vector<4x1xf32>
    %102 = vector.broadcast %101 : vector<4x1xf32> to vector<4x256xf32>
    %103 = arith.mulf %98, %102 : vector<4x256xf32>
    %cst_36 = arith.constant 0.000000e+00 : f32
    %104 = vector.broadcast %cst_36 : f32 to vector<4x256xf32>
    %105 = arith.maximumf %103, %104 : vector<4x256xf32>
    %c1_i32_37 = arith.constant 1 : i32
    %106 = tpu.dynamic_rotate %105 by %c1_i32_37 dim 1 : vector<4x256xf32>, i32 -> vector<4x256xf32>
    %c255_i32_38 = arith.constant 255 : i32
    %107 = tpu.dynamic_rotate %105 by %c255_i32_38 dim 1 : vector<4x256xf32>, i32 -> vector<4x256xf32>
    %108 = vector.shape_cast %22 : vector<1x256xi1> to vector<1x256xi1>
    %109 = vector.broadcast %108 : vector<1x256xi1> to vector<4x256xi1>
    %110 = arith.select %109, %107, %106 : vector<4x256xi1>, vector<4x256xf32>
    %c1_i32_39 = arith.constant 1 : i32
    %111 = tpu.dynamic_rotate %105 by %c1_i32_39 dim 1 : vector<4x256xf32>, i32 -> vector<4x256xf32>
    %c255_i32_40 = arith.constant 255 : i32
    %112 = tpu.dynamic_rotate %105 by %c255_i32_40 dim 1 : vector<4x256xf32>, i32 -> vector<4x256xf32>
    %113 = vector.shape_cast %24 : vector<1x256xi1> to vector<1x256xi1>
    %114 = vector.broadcast %113 : vector<1x256xi1> to vector<4x256xi1>
    %115 = arith.select %114, %111, %112 : vector<4x256xi1>, vector<4x256xf32>
    %c16_i32_41 = arith.constant 16 : i32
    %116 = tpu.dynamic_rotate %110 by %c16_i32_41 dim 1 : vector<4x256xf32>, i32 -> vector<4x256xf32>
    %c240_i32_42 = arith.constant 240 : i32
    %117 = tpu.dynamic_rotate %110 by %c240_i32_42 dim 1 : vector<4x256xf32>, i32 -> vector<4x256xf32>
    %118 = vector.shape_cast %26 : vector<1x256xi1> to vector<1x256xi1>
    %119 = vector.broadcast %118 : vector<1x256xi1> to vector<4x256xi1>
    %120 = arith.select %119, %117, %116 : vector<4x256xi1>, vector<4x256xf32>
    %121 = arith.truncf %120 : vector<4x256xf32> to vector<4x256xbf16>
    %c16_i32_43 = arith.constant 16 : i32
    %122 = tpu.dynamic_rotate %105 by %c16_i32_43 dim 1 : vector<4x256xf32>, i32 -> vector<4x256xf32>
    %c240_i32_44 = arith.constant 240 : i32
    %123 = tpu.dynamic_rotate %105 by %c240_i32_44 dim 1 : vector<4x256xf32>, i32 -> vector<4x256xf32>
    %124 = vector.shape_cast %26 : vector<1x256xi1> to vector<1x256xi1>
    %125 = vector.broadcast %124 : vector<1x256xi1> to vector<4x256xi1>
    %126 = arith.select %125, %123, %122 : vector<4x256xi1>, vector<4x256xf32>
    %127 = arith.truncf %126 : vector<4x256xf32> to vector<4x256xbf16>
    %c16_i32_45 = arith.constant 16 : i32
    %128 = tpu.dynamic_rotate %115 by %c16_i32_45 dim 1 : vector<4x256xf32>, i32 -> vector<4x256xf32>
    %c240_i32_46 = arith.constant 240 : i32
    %129 = tpu.dynamic_rotate %115 by %c240_i32_46 dim 1 : vector<4x256xf32>, i32 -> vector<4x256xf32>
    %130 = vector.shape_cast %26 : vector<1x256xi1> to vector<1x256xi1>
    %131 = vector.broadcast %130 : vector<1x256xi1> to vector<4x256xi1>
    %132 = arith.select %131, %129, %128 : vector<4x256xi1>, vector<4x256xf32>
    %133 = arith.truncf %132 : vector<4x256xf32> to vector<4x256xbf16>
    %134 = arith.truncf %110 : vector<4x256xf32> to vector<4x256xbf16>
    %135 = arith.truncf %105 : vector<4x256xf32> to vector<4x256xbf16>
    %136 = arith.truncf %115 : vector<4x256xf32> to vector<4x256xbf16>
    %c16_i32_47 = arith.constant 16 : i32
    %137 = tpu.dynamic_rotate %110 by %c16_i32_47 dim 1 : vector<4x256xf32>, i32 -> vector<4x256xf32>
    %c240_i32_48 = arith.constant 240 : i32
    %138 = tpu.dynamic_rotate %110 by %c240_i32_48 dim 1 : vector<4x256xf32>, i32 -> vector<4x256xf32>
    %139 = vector.shape_cast %28 : vector<1x256xi1> to vector<1x256xi1>
    %140 = vector.broadcast %139 : vector<1x256xi1> to vector<4x256xi1>
    %141 = arith.select %140, %137, %138 : vector<4x256xi1>, vector<4x256xf32>
    %142 = arith.truncf %141 : vector<4x256xf32> to vector<4x256xbf16>
    %c16_i32_49 = arith.constant 16 : i32
    %143 = tpu.dynamic_rotate %105 by %c16_i32_49 dim 1 : vector<4x256xf32>, i32 -> vector<4x256xf32>
    %c240_i32_50 = arith.constant 240 : i32
    %144 = tpu.dynamic_rotate %105 by %c240_i32_50 dim 1 : vector<4x256xf32>, i32 -> vector<4x256xf32>
    %145 = vector.shape_cast %28 : vector<1x256xi1> to vector<1x256xi1>
    %146 = vector.broadcast %145 : vector<1x256xi1> to vector<4x256xi1>
    %147 = arith.select %146, %143, %144 : vector<4x256xi1>, vector<4x256xf32>
    %148 = arith.truncf %147 : vector<4x256xf32> to vector<4x256xbf16>
    %c16_i32_51 = arith.constant 16 : i32
    %149 = tpu.dynamic_rotate %115 by %c16_i32_51 dim 1 : vector<4x256xf32>, i32 -> vector<4x256xf32>
    %c240_i32_52 = arith.constant 240 : i32
    %150 = tpu.dynamic_rotate %115 by %c240_i32_52 dim 1 : vector<4x256xf32>, i32 -> vector<4x256xf32>
    %151 = vector.shape_cast %28 : vector<1x256xi1> to vector<1x256xi1>
    %152 = vector.broadcast %151 : vector<1x256xi1> to vector<4x256xi1>
    %153 = arith.select %152, %149, %150 : vector<4x256xi1>, vector<4x256xf32>
    %154 = arith.truncf %153 : vector<4x256xf32> to vector<4x256xbf16>
    %155 = tpu.concatenate %121, %127, %133, %134, %135, %136, %142, %148, %154 in 0 : vector<4x256xbf16>, vector<4x256xbf16>, vector<4x256xbf16>, vector<4x256xbf16>, vector<4x256xbf16>, vector<4x256xbf16>, vector<4x256xbf16>, vector<4x256xbf16>, vector<4x256xbf16> -> vector<36x256xbf16>
    %cst_53 = arith.constant dense<0.000000e+00> : vector<4x256xf32>
    %156 = tpu.matmul %1, %155, %cst_53 {dimension_numbers = #tpu.dot_dimension_numbers<[1], [0], [0], [1], [0, 0, 1, 1], [], []>} : vector<4x36xbf16>, vector<36x256xbf16>, vector<4x256xf32> -> vector<4x256xf32>
    %157 = vector.broadcast %3 : vector<4x1xf32> to vector<4x256xf32>
    %158 = arith.addf %156, %157 : vector<4x256xf32>
    %cst_54 = arith.constant dense<0.000000e+00> : vector<4xf32>
    %159 = vector.multi_reduction <add>, %158, %cst_54 [1] : vector<4x256xf32> to vector<4xf32>
    %160 = vector.shape_cast %159 : vector<4xf32> to vector<4x1xf32>
    %161 = arith.mulf %158, %158 : vector<4x256xf32>
    %cst_55 = arith.constant dense<0.000000e+00> : vector<4xf32>
    %162 = vector.multi_reduction <add>, %161, %cst_55 [1] : vector<4x256xf32> to vector<4xf32>
    %163 = vector.shape_cast %162 : vector<4xf32> to vector<4x1xf32>
    %cst_56 = arith.constant 3.906250e-03 : f32
    %164 = vector.broadcast %cst_56 : f32 to vector<4x1xf32>
    %165 = arith.mulf %160, %164 : vector<4x1xf32>
    %cst_57 = arith.constant 3.906250e-03 : f32
    %166 = vector.broadcast %cst_57 : f32 to vector<4x1xf32>
    %167 = arith.mulf %163, %166 : vector<4x1xf32>
    %168 = arith.mulf %165, %165 : vector<4x1xf32>
    %169 = arith.subf %167, %168 : vector<4x1xf32>
    %cst_58 = arith.constant 0.000000e+00 : f32
    %170 = vector.broadcast %cst_58 : f32 to vector<4x1xf32>
    %171 = arith.maximumf %169, %170 : vector<4x1xf32>
    %172 = vector.broadcast %165 : vector<4x1xf32> to vector<4x256xf32>
    %173 = arith.subf %158, %172 : vector<4x256xf32>
    %cst_59 = arith.constant 9.99999974E-6 : f32
    %174 = vector.broadcast %cst_59 : f32 to vector<4x1xf32>
    %175 = arith.addf %171, %174 : vector<4x1xf32>
    %176 = math.rsqrt %175 : vector<4x1xf32>
    %177 = vector.broadcast %176 : vector<4x1xf32> to vector<4x256xf32>
    %178 = arith.mulf %173, %177 : vector<4x256xf32>
    %179 = arith.addf %30, %178 : vector<4x256xf32>
    %c0_60 = arith.constant 0 : index
    %c0_61 = arith.constant 0 : index
    %c0_62 = arith.constant 0 : index
    %180 = vector.load %arg6[%c0_60, %c0_61, %c0_62] : memref<1x4x256xf32, #tpu.memory_space<vmem>>, vector<1x4x256xf32>
    %181 = vector.shape_cast %180 : vector<1x4x256xf32> to vector<4x256xf32>
    %182 = vector.shape_cast %179 : vector<4x256xf32> to vector<1x4x256xf32>
    tpu.vector_store %arg6[%c0_60, %c0_61, %c0_62], %182 {strides = array<i32>} : memref<1x4x256xf32, #tpu.memory_space<vmem>>, vector<1x4x256xf32>,
    return
  }
  func.func @transform_0(%arg0: i32) -> (i32, i32, i32) {
    %c0_i32 = arith.constant 0 : i32
    %c0_i32_0 = arith.constant 0 : i32
    %c0_i32_1 = arith.constant 0 : i32
    return %arg0, %c0_i32, %c0_i32_0 : i32, i32, i32
  }
  func.func @transform_1(%arg0: i32) -> (i32, i32) {
    %c0_i32 = arith.constant 0 : i32
    %c0_i32_0 = arith.constant 0 : i32
    %c0_i32_1 = arith.constant 0 : i32
    return %c0_i32, %c0_i32_0 : i32, i32
  }
  func.func @transform_2(%arg0: i32) -> (i32, i32) {
    %c0_i32 = arith.constant 0 : i32
    %c0_i32_0 = arith.constant 0 : i32
    %c0_i32_1 = arith.constant 0 : i32
    return %c0_i32, %c0_i32_0 : i32, i32
  }
  func.func @transform_3(%arg0: i32) -> (i32, i32) {
    %c0_i32 = arith.constant 0 : i32
    %c0_i32_0 = arith.constant 0 : i32
    %c0_i32_1 = arith.constant 0 : i32
    return %c0_i32, %c0_i32_0 : i32, i32
  }
  func.func @transform_4(%arg0: i32) -> (i32, i32) {
    %c0_i32 = arith.constant 0 : i32
    %c0_i32_0 = arith.constant 0 : i32
    %c0_i32_1 = arith.constant 0 : i32
    return %c0_i32, %c0_i32_0 : i32, i32
  }
  func.func @transform_5(%arg0: i32) -> (i32, i32, i32) {
    %c0_i32 = arith.constant 0 : i32
    %c0_i32_0 = arith.constant 0 : i32
    %c0_i32_1 = arith.constant 0 : i32
    return %arg0, %c0_i32, %c0_i32_0 : i32, i32, i32
  }
}

module attributes {stable_mosaic.version = 11 : i64} {
  func.func @_resnet_block_kernel(%arg0: i32, %arg1: memref<1x4x256xf32, #tpu.memory_space<vmem>>, %arg2: memref<4x36xbf16, #tpu.memory_space<vmem>>, %arg3: memref<4x1xf32, #tpu.memory_space<vmem>>, %arg4: memref<4x36xbf16, #tpu.memory_space<vmem>>, %arg5: memref<4x1xf32, #tpu.memory_space<vmem>>, %arg6: memref<1x4x256xf32, #tpu.memory_space<vmem>>) attributes {dimension_semantics = [#tpu.dimension_semantics<parallel>], iteration_bounds = array<i64: 2>, scalar_prefetch = 0 : i64, scratch_operands = 0 : i64, tpu.core_type = #tpu.core_type<tc>, window_params = [{transform_indices = @transform_0, window_bounds = array<i64: 1, 4, 256>}, {pipeline_mode = #tpu.pipeline_mode<synchronous>, transform_indices = @transform_1, window_bounds = array<i64: 4, 36>}, {pipeline_mode = #tpu.pipeline_mode<synchronous>, transform_indices = @transform_2, window_bounds = array<i64: 4, 1>}, {pipeline_mode = #tpu.pipeline_mode<synchronous>, transform_indices = @transform_3, window_bounds = array<i64: 4, 36>}, {pipeline_mode = #tpu.pipeline_mode<synchronous>, transform_indices = @transform_4, window_bounds = array<i64: 4, 1>}, {transform_indices = @transform_5, window_bounds = array<i64: 1, 4, 256>}]} {
    %c0 = arith.constant 0 : index
    %c0_0 = arith.constant 0 : index
    %0 = vector.load %arg2[%c0, %c0_0] : memref<4x36xbf16, #tpu.memory_space<vmem>>, vector<4x36xbf16>
    %c0_1 = arith.constant 0 : index
    %c0_2 = arith.constant 0 : index
    %1 = vector.load %arg4[%c0_1, %c0_2] : memref<4x36xbf16, #tpu.memory_space<vmem>>, vector<4x36xbf16>
    %c0_3 = arith.constant 0 : index
    %c0_4 = arith.constant 0 : index
    %2 = vector.load %arg3[%c0_3, %c0_4] : memref<4x1xf32, #tpu.memory_space<vmem>>, vector<4x1xf32>
    %c0_5 = arith.constant 0 : index
    %c0_6 = arith.constant 0 : index
    %3 = vector.load %arg5[%c0_5, %c0_6] : memref<4x1xf32, #tpu.memory_space<vmem>>, vector<4x1xf32>
    %4 = tpu.iota {dimensions = array<i32: 1>} : vector<1x256xi32>
    %c16_i32 = arith.constant 16 : i32
    %c0_i32 = arith.constant 0 : i32
    %5 = arith.cmpi eq, %c16_i32, %c0_i32 : i32
    %c1_i32 = arith.constant 1 : i32
    %6 = arith.select %5, %c1_i32, %c16_i32 : i32
    %7 = vector.broadcast %6 : i32 to vector<1x256xi32>
    %8 = arith.remsi %4, %7 : vector<1x256xi32>
    %c0_i32_7 = arith.constant 0 : i32
    %9 = vector.broadcast %c0_i32_7 : i32 to vector<1x256xi32>
    %10 = arith.cmpi ne, %8, %9 : vector<1x256xi32>
    %c0_i32_8 = arith.constant 0 : i32
    %11 = vector.broadcast %c0_i32_8 : i32 to vector<1x256xi32>
    %12 = arith.cmpi slt, %8, %11 : vector<1x256xi32>
    %c0_i32_9 = arith.constant 0 : i32
    %13 = arith.cmpi slt, %6, %c0_i32_9 : i32
    %14 = vector.broadcast %13 : i1 to vector<1x256xi1>
    %15 = vector.broadcast %14 : vector<1x256xi1> to vector<1x256xi1>
    %16 = arith.xori %12, %15 : vector<1x256xi1>
    %17 = arith.andi %16, %10 : vector<1x256xi1>
    %18 = vector.broadcast %6 : i32 to vector<1x256xi32>
    %19 = arith.addi %8, %18 : vector<1x256xi32>
    %20 = arith.select %17, %19, %8 : vector<1x256xi1>, vector<1x256xi32>
    %c0_i32_10 = arith.constant 0 : i32
    %21 = vector.broadcast %c0_i32_10 : i32 to vector<1x256xi32>
    %22 = arith.cmpi eq, %20, %21 : vector<1x256xi32>
    %c15_i32 = arith.constant 15 : i32
    %23 = vector.broadcast %c15_i32 : i32 to vector<1x256xi32>
    %24 = arith.cmpi eq, %20, %23 : vector<1x256xi32>
    %c16_i32_11 = arith.constant 16 : i32
    %25 = vector.broadcast %c16_i32_11 : i32 to vector<1x256xi32>
    %26 = arith.cmpi slt, %4, %25 : vector<1x256xi32>
    %c240_i32 = arith.constant 240 : i32
    %27 = vector.broadcast %c240_i32 : i32 to vector<1x256xi32>
    %28 = arith.cmpi sge, %4, %27 : vector<1x256xi32>
    %c0_12 = arith.constant 0 : index
    %c0_13 = arith.constant 0 : index
    %c0_14 = arith.constant 0 : index
    %29 = vector.load %arg1[%c0_12, %c0_13, %c0_14] : memref<1x4x256xf32, #tpu.memory_space<vmem>>, vector<1x4x256xf32>
    %30 = vector.shape_cast %29 : vector<1x4x256xf32> to vector<4x256xf32>
    %c1_i32_15 = arith.constant 1 : i32
    %31 = tpu.dynamic_rotate %30 by %c1_i32_15 dim 1 : vector<4x256xf32>, i32 -> vector<4x256xf32>
    %c255_i32 = arith.constant 255 : i32
    %32 = tpu.dynamic_rotate %30 by %c255_i32 dim 1 : vector<4x256xf32>, i32 -> vector<4x256xf32>
    %33 = vector.shape_cast %22 : vector<1x256xi1> to vector<1x256xi1>
    %34 = vector.broadcast %33 : vector<1x256xi1> to vector<4x256xi1>
    %35 = arith.select %34, %32, %31 : vector<4x256xi1>, vector<4x256xf32>
    %c1_i32_16 = arith.constant 1 : i32
    %36 = tpu.dynamic_rotate %30 by %c1_i32_16 dim 1 : vector<4x256xf32>, i32 -> vector<4x256xf32>
    %c255_i32_17 = arith.constant 255 : i32
    %37 = tpu.dynamic_rotate %30 by %c255_i32_17 dim 1 : vector<4x256xf32>, i32 -> vector<4x256xf32>
    %38 = vector.shape_cast %24 : vector<1x256xi1> to vector<1x256xi1>
    %39 = vector.broadcast %38 : vector<1x256xi1> to vector<4x256xi1>
    %40 = arith.select %39, %36, %37 : vector<4x256xi1>, vector<4x256xf32>
    %c16_i32_18 = arith.constant 16 : i32
    %41 = tpu.dynamic_rotate %35 by %c16_i32_18 dim 1 : vector<4x256xf32>, i32 -> vector<4x256xf32>
    %c240_i32_19 = arith.constant 240 : i32
    %42 = tpu.dynamic_rotate %35 by %c240_i32_19 dim 1 : vector<4x256xf32>, i32 -> vector<4x256xf32>
    %43 = vector.shape_cast %26 : vector<1x256xi1> to vector<1x256xi1>
    %44 = vector.broadcast %43 : vector<1x256xi1> to vector<4x256xi1>
    %45 = arith.select %44, %42, %41 : vector<4x256xi1>, vector<4x256xf32>
    %46 = arith.truncf %45 : vector<4x256xf32> to vector<4x256xbf16>
    %c16_i32_20 = arith.constant 16 : i32
    %47 = tpu.dynamic_rotate %30 by %c16_i32_20 dim 1 : vector<4x256xf32>, i32 -> vector<4x256xf32>
    %c240_i32_21 = arith.constant 240 : i32
    %48 = tpu.dynamic_rotate %30 by %c240_i32_21 dim 1 : vector<4x256xf32>, i32 -> vector<4x256xf32>
    %49 = vector.shape_cast %26 : vector<1x256xi1> to vector<1x256xi1>
    %50 = vector.broadcast %49 : vector<1x256xi1> to vector<4x256xi1>
    %51 = arith.select %50, %48, %47 : vector<4x256xi1>, vector<4x256xf32>
    %52 = arith.truncf %51 : vector<4x256xf32> to vector<4x256xbf16>
    %c16_i32_22 = arith.constant 16 : i32
    %53 = tpu.dynamic_rotate %40 by %c16_i32_22 dim 1 : vector<4x256xf32>, i32 -> vector<4x256xf32>
    %c240_i32_23 = arith.constant 240 : i32
    %54 = tpu.dynamic_rotate %40 by %c240_i32_23 dim 1 : vector<4x256xf32>, i32 -> vector<4x256xf32>
    %55 = vector.shape_cast %26 : vector<1x256xi1> to vector<1x256xi1>
    %56 = vector.broadcast %55 : vector<1x256xi1> to vector<4x256xi1>
    %57 = arith.select %56, %54, %53 : vector<4x256xi1>, vector<4x256xf32>
    %58 = arith.truncf %57 : vector<4x256xf32> to vector<4x256xbf16>
    %59 = arith.truncf %35 : vector<4x256xf32> to vector<4x256xbf16>
    %60 = arith.truncf %30 : vector<4x256xf32> to vector<4x256xbf16>
    %61 = arith.truncf %40 : vector<4x256xf32> to vector<4x256xbf16>
    %c16_i32_24 = arith.constant 16 : i32
    %62 = tpu.dynamic_rotate %35 by %c16_i32_24 dim 1 : vector<4x256xf32>, i32 -> vector<4x256xf32>
    %c240_i32_25 = arith.constant 240 : i32
    %63 = tpu.dynamic_rotate %35 by %c240_i32_25 dim 1 : vector<4x256xf32>, i32 -> vector<4x256xf32>
    %64 = vector.shape_cast %28 : vector<1x256xi1> to vector<1x256xi1>
    %65 = vector.broadcast %64 : vector<1x256xi1> to vector<4x256xi1>
    %66 = arith.select %65, %62, %63 : vector<4x256xi1>, vector<4x256xf32>
    %67 = arith.truncf %66 : vector<4x256xf32> to vector<4x256xbf16>
    %c16_i32_26 = arith.constant 16 : i32
    %68 = tpu.dynamic_rotate %30 by %c16_i32_26 dim 1 : vector<4x256xf32>, i32 -> vector<4x256xf32>
    %c240_i32_27 = arith.constant 240 : i32
    %69 = tpu.dynamic_rotate %30 by %c240_i32_27 dim 1 : vector<4x256xf32>, i32 -> vector<4x256xf32>
    %70 = vector.shape_cast %28 : vector<1x256xi1> to vector<1x256xi1>
    %71 = vector.broadcast %70 : vector<1x256xi1> to vector<4x256xi1>
    %72 = arith.select %71, %68, %69 : vector<4x256xi1>, vector<4x256xf32>
    %73 = arith.truncf %72 : vector<4x256xf32> to vector<4x256xbf16>
    %c16_i32_28 = arith.constant 16 : i32
    %74 = tpu.dynamic_rotate %40 by %c16_i32_28 dim 1 : vector<4x256xf32>, i32 -> vector<4x256xf32>
    %c240_i32_29 = arith.constant 240 : i32
    %75 = tpu.dynamic_rotate %40 by %c240_i32_29 dim 1 : vector<4x256xf32>, i32 -> vector<4x256xf32>
    %76 = vector.shape_cast %28 : vector<1x256xi1> to vector<1x256xi1>
    %77 = vector.broadcast %76 : vector<1x256xi1> to vector<4x256xi1>
    %78 = arith.select %77, %74, %75 : vector<4x256xi1>, vector<4x256xf32>
    %79 = arith.truncf %78 : vector<4x256xf32> to vector<4x256xbf16>
    %80 = tpu.concatenate %46, %52, %58, %59, %60, %61, %67, %73, %79 in 0 : vector<4x256xbf16>, vector<4x256xbf16>, vector<4x256xbf16>, vector<4x256xbf16>, vector<4x256xbf16>, vector<4x256xbf16>, vector<4x256xbf16>, vector<4x256xbf16>, vector<4x256xbf16> -> vector<36x256xbf16>
    %cst = arith.constant dense<0.000000e+00> : vector<4x256xf32>
    %81 = tpu.matmul %0, %80, %cst {dimension_numbers = #tpu.dot_dimension_numbers<[1], [0], [0], [1], [0, 0, 1, 1], [], []>} : vector<4x36xbf16>, vector<36x256xbf16>, vector<4x256xf32> -> vector<4x256xf32>
    %82 = vector.broadcast %2 : vector<4x1xf32> to vector<4x256xf32>
    %83 = arith.addf %81, %82 : vector<4x256xf32>
    %cst_30 = arith.constant dense<0.000000e+00> : vector<4xf32>
    %84 = vector.multi_reduction <add>, %83, %cst_30 [1] : vector<4x256xf32> to vector<4xf32>
    %85 = vector.shape_cast %84 : vector<4xf32> to vector<4x1xf32>
    %86 = arith.mulf %83, %83 : vector<4x256xf32>
    %cst_31 = arith.constant dense<0.000000e+00> : vector<4xf32>
    %87 = vector.multi_reduction <add>, %86, %cst_31 [1] : vector<4x256xf32> to vector<4xf32>
    %88 = vector.shape_cast %87 : vector<4xf32> to vector<4x1xf32>
    %cst_32 = arith.constant 3.906250e-03 : f32
    %89 = vector.broadcast %cst_32 : f32 to vector<4x1xf32>
    %90 = arith.mulf %85, %89 : vector<4x1xf32>
    %cst_33 = arith.constant 3.906250e-03 : f32
    %91 = vector.broadcast %cst_33 : f32 to vector<4x1xf32>
    %92 = arith.mulf %88, %91 : vector<4x1xf32>
    %93 = arith.mulf %90, %90 : vector<4x1xf32>
    %94 = arith.subf %92, %93 : vector<4x1xf32>
    %cst_34 = arith.constant 0.000000e+00 : f32
    %95 = vector.broadcast %cst_34 : f32 to vector<4x1xf32>
    %96 = arith.maximumf %94, %95 : vector<4x1xf32>
    %97 = vector.broadcast %90 : vector<4x1xf32> to vector<4x256xf32>
    %98 = arith.subf %83, %97 : vector<4x256xf32>
    %cst_35 = arith.constant 9.99999974E-6 : f32
    %99 = vector.broadcast %cst_35 : f32 to vector<4x1xf32>
    %100 = arith.addf %96, %99 : vector<4x1xf32>
    %101 = math.rsqrt %100 : vector<4x1xf32>
    %102 = vector.broadcast %101 : vector<4x1xf32> to vector<4x256xf32>
    %103 = arith.mulf %98, %102 : vector<4x256xf32>
    %cst_36 = arith.constant 0.000000e+00 : f32
    %104 = vector.broadcast %cst_36 : f32 to vector<4x256xf32>
    %105 = arith.maximumf %103, %104 : vector<4x256xf32>
    %c1_i32_37 = arith.constant 1 : i32
    %106 = tpu.dynamic_rotate %105 by %c1_i32_37 dim 1 : vector<4x256xf32>, i32 -> vector<4x256xf32>
    %c255_i32_38 = arith.constant 255 : i32
    %107 = tpu.dynamic_rotate %105 by %c255_i32_38 dim 1 : vector<4x256xf32>, i32 -> vector<4x256xf32>
    %108 = vector.shape_cast %22 : vector<1x256xi1> to vector<1x256xi1>
    %109 = vector.broadcast %108 : vector<1x256xi1> to vector<4x256xi1>
    %110 = arith.select %109, %107, %106 : vector<4x256xi1>, vector<4x256xf32>
    %c1_i32_39 = arith.constant 1 : i32
    %111 = tpu.dynamic_rotate %105 by %c1_i32_39 dim 1 : vector<4x256xf32>, i32 -> vector<4x256xf32>
    %c255_i32_40 = arith.constant 255 : i32
    %112 = tpu.dynamic_rotate %105 by %c255_i32_40 dim 1 : vector<4x256xf32>, i32 -> vector<4x256xf32>
    %113 = vector.shape_cast %24 : vector<1x256xi1> to vector<1x256xi1>
    %114 = vector.broadcast %113 : vector<1x256xi1> to vector<4x256xi1>
    %115 = arith.select %114, %111, %112 : vector<4x256xi1>, vector<4x256xf32>
    %c16_i32_41 = arith.constant 16 : i32
    %116 = tpu.dynamic_rotate %110 by %c16_i32_41 dim 1 : vector<4x256xf32>, i32 -> vector<4x256xf32>
    %c240_i32_42 = arith.constant 240 : i32
    %117 = tpu.dynamic_rotate %110 by %c240_i32_42 dim 1 : vector<4x256xf32>, i32 -> vector<4x256xf32>
    %118 = vector.shape_cast %26 : vector<1x256xi1> to vector<1x256xi1>
    %119 = vector.broadcast %118 : vector<1x256xi1> to vector<4x256xi1>
    %120 = arith.select %119, %117, %116 : vector<4x256xi1>, vector<4x256xf32>
    %121 = arith.truncf %120 : vector<4x256xf32> to vector<4x256xbf16>
    %c16_i32_43 = arith.constant 16 : i32
    %122 = tpu.dynamic_rotate %105 by %c16_i32_43 dim 1 : vector<4x256xf32>, i32 -> vector<4x256xf32>
    %c240_i32_44 = arith.constant 240 : i32
    %123 = tpu.dynamic_rotate %105 by %c240_i32_44 dim 1 : vector<4x256xf32>, i32 -> vector<4x256xf32>
    %124 = vector.shape_cast %26 : vector<1x256xi1> to vector<1x256xi1>
    %125 = vector.broadcast %124 : vector<1x256xi1> to vector<4x256xi1>
    %126 = arith.select %125, %123, %122 : vector<4x256xi1>, vector<4x256xf32>
    %127 = arith.truncf %126 : vector<4x256xf32> to vector<4x256xbf16>
    %c16_i32_45 = arith.constant 16 : i32
    %128 = tpu.dynamic_rotate %115 by %c16_i32_45 dim 1 : vector<4x256xf32>, i32 -> vector<4x256xf32>
    %c240_i32_46 = arith.constant 240 : i32
    %129 = tpu.dynamic_rotate %115 by %c240_i32_46 dim 1 : vector<4x256xf32>, i32 -> vector<4x256xf32>
    %130 = vector.shape_cast %26 : vector<1x256xi1> to vector<1x256xi1>
    %131 = vector.broadcast %130 : vector<1x256xi1> to vector<4x256xi1>
    %132 = arith.select %131, %129, %128 : vector<4x256xi1>, vector<4x256xf32>
    %133 = arith.truncf %132 : vector<4x256xf32> to vector<4x256xbf16>
    %134 = arith.truncf %110 : vector<4x256xf32> to vector<4x256xbf16>
    %135 = arith.truncf %105 : vector<4x256xf32> to vector<4x256xbf16>
    %136 = arith.truncf %115 : vector<4x256xf32> to vector<4x256xbf16>
    %c16_i32_47 = arith.constant 16 : i32
    %137 = tpu.dynamic_rotate %110 by %c16_i32_47 dim 1 : vector<4x256xf32>, i32 -> vector<4x256xf32>
    %c240_i32_48 = arith.constant 240 : i32
    %138 = tpu.dynamic_rotate %110 by %c240_i32_48 dim 1 : vector<4x256xf32>, i32 -> vector<4x256xf32>
    %139 = vector.shape_cast %28 : vector<1x256xi1> to vector<1x256xi1>
    %140 = vector.broadcast %139 : vector<1x256xi1> to vector<4x256xi1>
    %141 = arith.select %140, %137, %138 : vector<4x256xi1>, vector<4x256xf32>
    %142 = arith.truncf %141 : vector<4x256xf32> to vector<4x256xbf16>
    %c16_i32_49 = arith.constant 16 : i32
    %143 = tpu.dynamic_rotate %105 by %c16_i32_49 dim 1 : vector<4x256xf32>, i32 -> vector<4x256xf32>
    %c240_i32_50 = arith.constant 240 : i32
    %144 = tpu.dynamic_rotate %105 by %c240_i32_50 dim 1 : vector<4x256xf32>, i32 -> vector<4x256xf32>
    %145 = vector.shape_cast %28 : vector<1x256xi1> to vector<1x256xi1>
    %146 = vector.broadcast %145 : vector<1x256xi1> to vector<4x256xi1>
    %147 = arith.select %146, %143, %144 : vector<4x256xi1>, vector<4x256xf32>
    %148 = arith.truncf %147 : vector<4x256xf32> to vector<4x256xbf16>
    %c16_i32_51 = arith.constant 16 : i32
    %149 = tpu.dynamic_rotate %115 by %c16_i32_51 dim 1 : vector<4x256xf32>, i32 -> vector<4x256xf32>
    %c240_i32_52 = arith.constant 240 : i32
    %150 = tpu.dynamic_rotate %115 by %c240_i32_52 dim 1 : vector<4x256xf32>, i32 -> vector<4x256xf32>
    %151 = vector.shape_cast %28 : vector<1x256xi1> to vector<1x256xi1>
    %152 = vector.broadcast %151 : vector<1x256xi1> to vector<4x256xi1>
    %153 = arith.select %152, %149, %150 : vector<4x256xi1>, vector<4x256xf32>
    %154 = arith.truncf %153 : vector<4x256xf32> to vector<4x256xbf16>
    %155 = tpu.concatenate %121, %127, %133, %134, %135, %136, %142, %148, %154 in 0 : vector<4x256xbf16>, vector<4x256xbf16>, vector<4x256xbf16>, vector<4x256xbf16>, vector<4x256xbf16>, vector<4x256xbf16>, vector<4x256xbf16>, vector<4x256xbf16>, vector<4x256xbf16> -> vector<36x256xbf16>
    %cst_53 = arith.constant dense<0.000000e+00> : vector<4x256xf32>
    %156 = tpu.matmul %1, %155, %cst_53 {dimension_numbers = #tpu.dot_dimension_numbers<[1], [0], [0], [1], [0, 0, 1, 1], [], []>} : vector<4x36xbf16>, vector<36x256xbf16>, vector<4x256xf32> -> vector<4x256xf32>
    %157 = vector.broadcast %3 : vector<4x1xf32> to vector<4x256xf32>
    %158 = arith.addf %156, %157 : vector<4x256xf32>
    %cst_54 = arith.constant dense<0.000000e+00> : vector<4xf32>
    %159 = vector.multi_reduction <add>, %158, %cst_54 [1] : vector<4x256xf32> to vector<4xf32>
    %160 = vector.shape_cast %159 : vector<4xf32> to vector<4x1xf32>
    %161 = arith.mulf %158, %158 : vector<4x256xf32>
    %cst_55 = arith.constant dense<0.000000e+00> : vector<4xf32>
    %162 = vector.multi_reduction <add>, %161, %cst_55 [1] : vector<4x256xf32> to vector<4xf32>
    %163 = vector.shape_cast %162 : vector<4xf32> to vector<4x1xf32>
    %cst_56 = arith.constant 3.906250e-03 : f32
    %164 = vector.broadcast %cst_56 : f32 to vector<4x1xf32>
    %165 = arith.mulf %160, %164 : vector<4x1xf32>
    %cst_57 = arith.constant 3.906250e-03 : f32
    %166 = vector.broadcast %cst_57 : f32 to vector<4x1xf32>
    %167 = arith.mulf %163, %166 : vector<4x1xf32>
    %168 = arith.mulf %165, %165 : vector<4x1xf32>
    %169 = arith.subf %167, %168 : vector<4x1xf32>
    %cst_58 = arith.constant 0.000000e+00 : f32
    %170 = vector.broadcast %cst_58 : f32 to vector<4x1xf32>
    %171 = arith.maximumf %169, %170 : vector<4x1xf32>
    %172 = vector.broadcast %165 : vector<4x1xf32> to vector<4x256xf32>
    %173 = arith.subf %158, %172 : vector<4x256xf32>
    %cst_59 = arith.constant 9.99999974E-6 : f32
    %174 = vector.broadcast %cst_59 : f32 to vector<4x1xf32>
    %175 = arith.addf %171, %174 : vector<4x1xf32>
    %176 = math.rsqrt %175 : vector<4x1xf32>
    %177 = vector.broadcast %176 : vector<4x1xf32> to vector<4x256xf32>
    %178 = arith.mulf %173, %177 : vector<4x256xf32>
    %179 = arith.addf %30, %178 : vector<4x256xf32>
    %c0_60 = arith.constant 0 : index
    %c0_61 = arith.constant 0 : index
    %c0_62 = arith.constant 0 : index
    %180 = vector.load %arg6[%c0_60, %c0_61, %c0_62] : memref<1x4x256xf32, #tpu.memory_space<vmem>>, vector<1x4x256xf32>
    %181 = vector.shape_cast %180 : vector<1x4x256xf32> to vector<4x256xf32>
    %182 = vector.shape_cast %179 : vector<4x256xf32> to vector<1x4x256xf32>
    tpu.vector_store %arg6[%c0_60, %c0_61, %c0_62], %182 {strides = array<i32>} : memref<1x4x256xf32, #tpu.memory_space<vmem>>, vector<1x4x256xf32>,
    return
  }
  func.func @transform_0(%arg0: i32) -> (i32, i32, i32) {
    %c0_i32 = arith.constant 0 : i32
    %c0_i32_0 = arith.constant 0 : i32
    %c0_i32_1 = arith.constant 0 : i32
    return %arg0, %c0_i32, %c0_i32_0 : i32, i32, i32
  }
  func.func @transform_1(%arg0: i32) -> (i32, i32) {
    %c0_i32 = arith.constant 0 : i32
    %c0_i32_0 = arith.constant 0 : i32
    %c0_i32_1 = arith.constant 0 : i32
    return %c0_i32, %c0_i32_0 : i32, i32
  }
  func.func @transform_2(%arg0: i32) -> (i32, i32) {
    %c0_i32 = arith.constant 0 : i32
    %c0_i32_0 = arith.constant 0 : i32
    %c0_i32_1 = arith.constant 0 : i32
    return %c0_i32, %c0_i32_0 : i32, i32
  }
  func.func @transform_3(%arg0: i32) -> (i32, i32) {
    %c0_i32 = arith.constant 0 : i32
    %c0_i32_0 = arith.constant 0 : i32
    %c0_i32_1 = arith.constant 0 : i32
    return %c0_i32, %c0_i32_0 : i32, i32
  }
  func.func @transform_4(%arg0: i32) -> (i32, i32) {
    %c0_i32 = arith.constant 0 : i32
    %c0_i32_0 = arith.constant 0 : i32
    %c0_i32_1 = arith.constant 0 : i32
    return %c0_i32, %c0_i32_0 : i32, i32
  }
  func.func @transform_5(%arg0: i32) -> (i32, i32, i32) {
    %c0_i32 = arith.constant 0 : i32
    %c0_i32_0 = arith.constant 0 : i32
    %c0_i32_1 = arith.constant 0 : i32
    return %arg0, %c0_i32, %c0_i32_0 : i32, i32, i32
  }
}

</mosaic_0001>

<llo_original>
// kernel: resnet_block_nchw.1
$region0: #{resnet_block_nchw.1}
  #allocation0 [shape = 'u32[]', space=smem, size = 0x4, offset = 0x4, fixed_abs, tag = 'smem constant byte address 0x4 - core index']
  #allocation1 [shape = 'u32[72,128]{1,0:T(1,128)}', space=vmem, size = 0x9000, scoped, tag = 'internal scratch']
  %s0 = inlined_call_operand.vmem [shape: f32[2,4,256], index: 0, kind: input, shape index: {}]
  %s1 = inlined_call_operand.vmem [shape: bf16[4,36], index: 1, kind: input, shape index: {}]
  %s2 = inlined_call_operand.vmem [shape: f32[4,1], index: 2, kind: input, shape index: {}]
  %s3 = inlined_call_operand.vmem [shape: bf16[4,36], index: 3, kind: input, shape index: {}]
  %s4 = inlined_call_operand.vmem [shape: f32[4,1], index: 4, kind: input, shape index: {}]
  %s5 = inlined_call_operand.vmem [shape: f32[2,4,256], index: 5, kind: output, shape index: {}]
  %s6 = sld [smem:[#allocation0]]
  $region53: #{resnet_block_nchw.1} parent=0
    _
  %s8 = ssub.s32 1, %s6
  %s9 = scalar_select 0, %s8, %s6
  loop: start=0, step=1, limit=4
  $region2: #{resnet_block_nchw.1} parent=0 // loop_pre_header
    _
  $region3: #{resnet_block_nchw.1} parent=0 // loop_header
    %s11 = sphi 0, %s15
    %p12 = scmp.ge.s32.totalorder %s11, 4
    %s21 = sphi 0, %s23
    %s24 = sphi 0, %s21
    %s25 = sphi 0, %s24
    %s41 = sphi 0, %s25
    %s45 = sphi 0, %s45
    %s47 = sphi 0, %s45
    %s48 = sphi 0, %s47
    %s62 = sphi 0, %s48
    %s66 = sphi 0, %s66
    %s68 = sphi 0, %s66
    %s69 = sphi 0, %s68
    %s83 = sphi 0, %s69
    %s87 = sphi 0, %s87
    %s89 = sphi 0, %s87
    %s90 = sphi 0, %s89
    %s104 = sphi 0, %s90
    %s108 = sphi 0, %s108
    %s110 = sphi 0, %s108
    %s111 = sphi 0, %s110
    %s125 = sphi 0, %s111
    %s131 = sphi 0, %s133
    %s134 = sphi 0, %s131
    %s135 = sphi 0, %s134
    %s151 = sphi 0, %s135
  $region4: #{resnet_block_nchw.1} parent=0 // loop_header_branch
    %14 = sbr.rel (%p12) target = $region8
  $region5: #{resnet_block_nchw.1} parent=0 // loop_body
    %s16 = ssub.s32 %s11, 1
    %s17 = ssub.s32 %s11, 2
    %s18 = sadd.s32 %s11, 1
    %s19 = ssub.s32 %s11, %s18
    %p20 = scmp.eq.s32.totalorder %s19, 0
    %s22 = sadd.s32 %s21, 1
    %s23 = scalar_select %p20, %s21, %s22
    %p26 = pneg %p20
    %p27 = scmp.eq.s32.totalorder %s11, 1
    %p28 = por %p26, %p27
    %p29 = scmp.ne.s32.totalorder %s21, %s24
    %p30 = scmp.eq.s32.totalorder %s11, 0
    %p31 = por %p29, %p30
    %p32 = scmp.ne.s32.totalorder %s21, %s24
    %p33 = scmp.eq.s32.totalorder %s16, 1
    %p34 = por %p32, %p33
    %p35 = scmp.ne.s32.totalorder %s24, %s25
    %p36 = scmp.eq.s32.totalorder %s16, 0
    %p37 = por %p35, %p36
    %p38 = scmp.ne.s32.totalorder %s24, %s25
    %p39 = scmp.eq.s32.totalorder %s17, 1
    %p40 = por %p38, %p39
    %p42 = scmp.ne.s32.totalorder %s25, %s41
    %p43 = scmp.eq.s32.totalorder %s17, 0
    %p44 = por %p42, %p43
    %s46 = sadd.s32 %s45, 1
    %p49 = scmp.eq.s32.totalorder %s11, 1
    %p50 = scmp.ne.s32.totalorder %s45, %s47
    %p51 = scmp.eq.s32.totalorder %s11, 0
    %p52 = por %p50, %p51
    %p53 = scmp.ne.s32.totalorder %s45, %s47
    %p54 = scmp.eq.s32.totalorder %s16, 1
    %p55 = por %p53, %p54
    %p56 = scmp.ne.s32.totalorder %s47, %s48
    %p57 = scmp.eq.s32.totalorder %s16, 0
    %p58 = por %p56, %p57
    %p59 = scmp.ne.s32.totalorder %s47, %s48
    %p60 = scmp.eq.s32.totalorder %s17, 1
    %p61 = por %p59, %p60
    %p63 = scmp.ne.s32.totalorder %s48, %s62
    %p64 = scmp.eq.s32.totalorder %s17, 0
    %p65 = por %p63, %p64
    %s67 = sadd.s32 %s66, 1
    %p70 = scmp.eq.s32.totalorder %s11, 1
    %p71 = scmp.ne.s32.totalorder %s66, %s68
    %p72 = scmp.eq.s32.totalorder %s11, 0
    %p73 = por %p71, %p72
    %p74 = scmp.ne.s32.totalorder %s66, %s68
    %p75 = scmp.eq.s32.totalorder %s16, 1
    %p76 = por %p74, %p75
    %p77 = scmp.ne.s32.totalorder %s68, %s69
    %p78 = scmp.eq.s32.totalorder %s16, 0
    %p79 = por %p77, %p78
    %p80 = scmp.ne.s32.totalorder %s68, %s69
    %p81 = scmp.eq.s32.totalorder %s17, 1
    %p82 = por %p80, %p81
    %p84 = scmp.ne.s32.totalorder %s69, %s83
    %p85 = scmp.eq.s32.totalorder %s17, 0
    %p86 = por %p84, %p85
    %s88 = sadd.s32 %s87, 1
    %p91 = scmp.eq.s32.totalorder %s11, 1
    %p92 = scmp.ne.s32.totalorder %s87, %s89
    %p93 = scmp.eq.s32.totalorder %s11, 0
    %p94 = por %p92, %p93
    %p95 = scmp.ne.s32.totalorder %s87, %s89
    %p96 = scmp.eq.s32.totalorder %s16, 1
    %p97 = por %p95, %p96
    %p98 = scmp.ne.s32.totalorder %s89, %s90
    %p99 = scmp.eq.s32.totalorder %s16, 0
    %p100 = por %p98, %p99
    %p101 = scmp.ne.s32.totalorder %s89, %s90
    %p102 = scmp.eq.s32.totalorder %s17, 1
    %p103 = por %p101, %p102
    %p105 = scmp.ne.s32.totalorder %s90, %s104
    %p106 = scmp.eq.s32.totalorder %s17, 0
    %p107 = por %p105, %p106
    %s109 = sadd.s32 %s108, 1
    %p112 = scmp.eq.s32.totalorder %s11, 1
    %p113 = scmp.ne.s32.totalorder %s108, %s110
    %p114 = scmp.eq.s32.totalorder %s11, 0
    %p115 = por %p113, %p114
    %p116 = scmp.ne.s32.totalorder %s108, %s110
    %p117 = scmp.eq.s32.totalorder %s16, 1
    %p118 = por %p116, %p117
    %p119 = scmp.ne.s32.totalorder %s110, %s111
    %p120 = scmp.eq.s32.totalorder %s16, 0
    %p121 = por %p119, %p120
    %p122 = scmp.ne.s32.totalorder %s110, %s111
    %p123 = scmp.eq.s32.totalorder %s17, 1
    %p124 = por %p122, %p123
    %p126 = scmp.ne.s32.totalorder %s111, %s125
    %p127 = scmp.eq.s32.totalorder %s17, 0
    %p128 = por %p126, %p127
    %s129 = ssub.s32 %s11, %s18
    %p130 = scmp.eq.s32.totalorder %s129, 0
    %s132 = sadd.s32 %s131, 1
    %s133 = scalar_select %p130, %s131, %s132
    %p136 = pneg %p130
    %p137 = scmp.eq.s32.totalorder %s11, 1
    %p138 = por %p136, %p137
    %p139 = scmp.ne.s32.totalorder %s131, %s134
    %p140 = scmp.eq.s32.totalorder %s11, 0
    %p141 = por %p139, %p140
    %p142 = scmp.ne.s32.totalorder %s131, %s134
    %p143 = scmp.eq.s32.totalorder %s16, 1
    %p144 = por %p142, %p143
    %p145 = scmp.ne.s32.totalorder %s134, %s135
    %p146 = scmp.eq.s32.totalorder %s16, 0
    %p147 = por %p145, %p146
    %p148 = scmp.ne.s32.totalorder %s134, %s135
    %p149 = scmp.eq.s32.totalorder %s17, 1
    %p150 = por %p148, %p149
    %p152 = scmp.ne.s32.totalorder %s135, %s151
    %p153 = scmp.eq.s32.totalorder %s17, 0
    %p154 = por %p152, %p153
    %p155 = scmp.le.s32.totalorder 1, %s11
    %p156 = scmp.lt.s32.totalorder %s11, 3
    %p157 = pnand %p155, %p156
    %p158 = pneg %p157
    // Predicated region
    $region9: #{resnet_block_nchw.1} parent=5 // pred_check
      _
    $region10: #{resnet_block_nchw.1} parent=5 // pred_check_branch
      %160 = sbr.rel (%p157) target = $region12
    $region11: #{resnet_block_nchw.1} parent=5 // pred_region
      %s161 = ssub.s32 %s11, 1
      // Predicated region
      $region13: #{resnet_block_nchw.1} parent=11 // pred_check
        %p162 = pneg %p58
      $region14: #{resnet_block_nchw.1} parent=11 // pred_check_branch
        %164 = sbr.rel (%p162) target = $region16
      $region15: #{resnet_block_nchw.1} parent=11 // pred_region
        _
      $region16: #{resnet_block_nchw.1} parent=11 // pred_fallthru
        _
      // Predicated region
      $region17: #{resnet_block_nchw.1} parent=11 // pred_check
        %p165 = pneg %p79
      $region18: #{resnet_block_nchw.1} parent=11 // pred_check_branch
        %167 = sbr.rel (%p165) target = $region20
      $region19: #{resnet_block_nchw.1} parent=11 // pred_region
        _
      $region20: #{resnet_block_nchw.1} parent=11 // pred_fallthru
        _
      // Predicated region
      $region21: #{resnet_block_nchw.1} parent=11 // pred_check
        %p168 = pneg %p100
      $region22: #{resnet_block_nchw.1} parent=11 // pred_check_branch
        %170 = sbr.rel (%p168) target = $region24
      $region23: #{resnet_block_nchw.1} parent=11 // pred_region
        _
      $region24: #{resnet_block_nchw.1} parent=11 // pred_fallthru
        _
      // Predicated region
      $region25: #{resnet_block_nchw.1} parent=11 // pred_check
        %p171 = pneg %p121
      $region26: #{resnet_block_nchw.1} parent=11 // pred_check_branch
        %173 = sbr.rel (%p171) target = $region28
      $region27: #{resnet_block_nchw.1} parent=11 // pred_region
        _
      $region28: #{resnet_block_nchw.1} parent=11 // pred_fallthru
        _
    $region12: #{resnet_block_nchw.1} parent=5 // pred_fallthru
      _
    %p174 = scmp.lt.s32.totalorder %s11, 2
    // Predicated region
    $region29: #{resnet_block_nchw.1} parent=5 // pred_check
      %p175 = pneg %p174
    $region30: #{resnet_block_nchw.1} parent=5 // pred_check_branch
      %177 = sbr.rel (%p175) target = $region32
    $region31: #{resnet_block_nchw.1} parent=5 // pred_region
      // Predicated region
      $region33: #{resnet_block_nchw.1} parent=31 // pred_check
        %p178 = pneg %p31
      $region34: #{resnet_block_nchw.1} parent=31 // pred_check_branch
        %180 = sbr.rel (%p178) target = $region36
      $region35: #{resnet_block_nchw.1} parent=31 // pred_region
        %p181 = scmp.lt.s32.totalorder %s11, 1
        %s182 = scalar_select %p181, %s11, 1
        %s183 = smul.addr %s182, 2
        %s184 = smul.addr %s183, 4
        %s185 = scalar_lea.vmem %s0, %s184
      $region36: #{resnet_block_nchw.1} parent=31 // pred_fallthru
        _
    $region32: #{resnet_block_nchw.1} parent=5 // pred_fallthru
      _
    %p186 = scmp.le.s32.totalorder 1, %s11
    %p187 = scmp.lt.s32.totalorder %s11, 3
    %p188 = pnand %p186, %p187
    %p189 = pneg %p188
    // Predicated region
    $region37: #{resnet_block_nchw.1} parent=5 // pred_check
      _
    $region38: #{resnet_block_nchw.1} parent=5 // pred_check_branch
      %191 = sbr.rel (%p188) target = $region40
    $region39: #{resnet_block_nchw.1} parent=5 // pred_region
      %s192 = ssub.s32 %s11, 1
      %p193 = scmp.lt.s32.totalorder %s16, 1
      %s194 = scalar_select %p193, %s16, 1
      %s195 = smul.addr %s194, 2
      %s196 = smul.addr %s195, 4
      %s197 = scalar_lea.vmem %s0, %s196
      %p198 = pneg %p37
      %p199 = pneg %p34
      %p200 = pneg %p58
      %p201 = pneg %p55
      %p202 = pneg %p79
      %p203 = pneg %p76
      %p204 = pneg %p100
      %p205 = pneg %p97
      %p206 = pneg %p121
      %p207 = pneg %p118
      %p208 = pneg %p147
      %p209 = pneg %p144
      %p210 = scmp.lt.s32.totalorder %s16, 1
      %s211 = scalar_select %p210, %s16, 1
      %s212 = smul.addr %s211, 2
      %s213 = smul.addr %s212, 4
      %s214 = scalar_lea.vmem %s5, %s213
      %p215 = scmp.lt.s32.totalorder %s16, 1
      %s216 = scalar_select %p215, %s16, 1
      %s217 = smul.addr %s216, 2
      %s218 = smul.addr %s217, 4
      %s219 = scalar_lea.vmem %s0, %s218
      %p220 = scmp.lt.s32.totalorder %s16, 1
      %s221 = scalar_select %p220, %s16, 1
      %s222 = smul.addr %s221, 2
      %s223 = smul.addr %s222, 4
      %s224 = scalar_lea.vmem %s5, %s223
      %v226 = vld [vmem:[%s1] sm:$0x3]
      %v227 = vld [vmem:[%s3] sm:$0x3]
      %v228 = vld [vmem:[%s2] sm:$0xf]
      %v229 = vld [vmem:[%s4] sm:$0xf]
      %v230 = vlaneseq
      %v231 = vand.u32 %v230, 127
      %v232 = vadd.s32 %v231, 128
      %vm233 = vcmp.lt.s32.totalorder %v231, 0
      %v234 = vsub.s32 0, %v231
      %v235 = vsel %vm233, %v234, %v231
      %v236 = vshrl.u32 %v235, 4
      %v237 = vand.u32 %v235, 15
      %v238 = vsub.s32 0, %v237
      %v239 = vsel %vm233, %v238, %v237
      %vm240 = vcmp.lt.s32.totalorder %v232, 0
      %v241 = vsub.s32 0, %v232
      %v242 = vsel %vm240, %v241, %v232
      %v243 = vshrl.u32 %v242, 4
      %v244 = vand.u32 %v242, 15
      %v245 = vsub.s32 0, %v244
      %v246 = vsel %vm240, %v245, %v244
      %vm247 = vcmp.ne.s32.totalorder %v239, 0
      %vm248 = vcmp.ne.s32.totalorder %v246, 0
      %vm249 = vcmp.lt.s32.totalorder %v239, 0
      %vm250 = vcmp.lt.s32.totalorder %v246, 0
      %vm251 = vmand %vm249, %vm247
      %vm252 = vmand %vm250, %vm248
      %v253 = vadd.s32 %v239, 16
      %v254 = vadd.s32 %v246, 16
      %v255 = vsel %vm251, %v253, %v239
      %v256 = vsel %vm252, %v254, %v246
      %vm257 = vcmp.eq.s32.totalorder %v255, 0
      %vm258 = vcmp.eq.s32.totalorder %v256, 0
      %vm259 = vcmp.eq.s32.totalorder %v255, 15
      %vm260 = vcmp.eq.s32.totalorder %v256, 15
      %vm261 = vcmp.lt.s32.totalorder %v231, 16
      %vm262 = vcmp.lt.s32.totalorder %v232, 16
      %vm263 = vcmp.ge.s32.totalorder %v231, 240
      %vm264 = vcmp.ge.s32.totalorder %v232, 240
      %v265 = vld [vmem:[%s219] sm:$0xff]
      %267 = vst [vmem:[#allocation1] ss:$2 sm:$0xff] %v265
      %v268 = vld.sshfl [vmem:[#allocation1] sm:$0xff pattern:$0x75316420]
      %v269 = vld.sshfl [vmem:[#allocation1 + $0x8] sm:$0xff pattern:$0x75316420]
      %272 = vrot.lane.b32.xlu0 %v268, 1
      %v273 = vpop.permute.xlu0 %272
      %274 = vrot.lane.b32.xlu0 %v269, 1
      %v275 = vpop.permute.xlu0 %274
      %vm276 = vcmp.lt.s32.totalorder %v231, 1
      %v277 = vsel %vm276, %v273, %v275
      %v278 = vsel %vm276, %v275, %v273
      %279 = vst [vmem:[#allocation1] ss:$2 sm:$0xff] %v265
      %v280 = vld.sshfl [vmem:[#allocation1] sm:$0xff pattern:$0x75316420]
      %v281 = vld.sshfl [vmem:[#allocation1 + $0x8] sm:$0xff pattern:$0x75316420]
      %284 = vrot.lane.b32.xlu0 %v280, 127
      %v285 = vpop.permute.xlu0 %284
      %286 = vrot.lane.b32.xlu0 %v281, 127
      %v287 = vpop.permute.xlu0 %286
      %vm288 = vcmp.lt.s32.totalorder %v231, 127
      %v289 = vsel %vm288, %v285, %v287
      %v290 = vsel %vm288, %v287, %v285
      %v291 = vsel %vm257, 1, 0
      %v292 = vsel %vm258, 1, 0
      %vm293 = vcmp.eq.s32.totalorder %v291, 1
      %vm294 = vcmp.eq.s32.totalorder %v292, 1
      %v295 = vsel %vm293, %v289, %v278
      %v296 = vsel %vm294, %v290, %v277
      %v297 = vsel %vm259, 1, 0
      %v298 = vsel %vm260, 1, 0
      %vm299 = vcmp.eq.s32.totalorder %v297, 1
      %vm300 = vcmp.eq.s32.totalorder %v298, 1
      %v301 = vsel %vm299, %v278, %v289
      %v302 = vsel %vm300, %v277, %v290
      %303 = vrot.lane.b32.xlu0 %v295, 16
      %v304 = vpop.permute.xlu0 %303
      %305 = vrot.lane.b32.xlu0 %v296, 16
      %v306 = vpop.permute.xlu0 %305
      %v307 = vsel %vm261, %v304, %v306
      %v308 = vsel %vm261, %v306, %v304
      %309 = vrot.lane.b32.xlu0 %v295, 112
      %v310 = vpop.permute.xlu0 %309
      %311 = vrot.lane.b32.xlu0 %v296, 112
      %v312 = vpop.permute.xlu0 %311
      %vm313 = vcmp.lt.s32.totalorder %v231, 112
      %v314 = vsel %vm313, %v310, %v312
      %v315 = vsel %vm313, %v312, %v310
      %v316 = vsel %vm261, 1, 0
      %v317 = vsel %vm262, 1, 0
      %vm318 = vcmp.eq.s32.totalorder %v316, 1
      %vm319 = vcmp.eq.s32.totalorder %v317, 1
      %v320 = vsel %vm318, %v314, %v308
      %v321 = vsel %vm319, %v315, %v307
      %v322 = vpack.c.bf16 %v321, %v320
      %323 = vst [vmem:[#allocation1] ss:$2 sm:$0xff] %v265
      %v324 = vld.sshfl [vmem:[#allocation1] sm:$0xff pattern:$0x75316420]
      %v325 = vld.sshfl [vmem:[#allocation1 + $0x8] sm:$0xff pattern:$0x75316420]
      %328 = vrot.lane.b32.xlu0 %v324, 16
      %v329 = vpop.permute.xlu0 %328
      %330 = vrot.lane.b32.xlu0 %v325, 16
      %v331 = vpop.permute.xlu0 %330
      %v332 = vsel %vm261, %v329, %v331
      %v333 = vsel %vm261, %v331, %v329
      %334 = vst [vmem:[#allocation1] ss:$2 sm:$0xff] %v265
      %v335 = vld.sshfl [vmem:[#allocation1] sm:$0xff pattern:$0x75316420]
      %v336 = vld.sshfl [vmem:[#allocation1 + $0x8] sm:$0xff pattern:$0x75316420]
      %339 = vrot.lane.b32.xlu0 %v335, 112
      %v340 = vpop.permute.xlu0 %339
      %341 = vrot.lane.b32.xlu0 %v336, 112
      %v342 = vpop.permute.xlu0 %341
      %v343 = vsel %vm313, %v340, %v342
      %v344 = vsel %vm313, %v342, %v340
      %v345 = vsel %vm318, %v343, %v333
      %v346 = vsel %vm319, %v344, %v332
      %v347 = vpack.c.bf16 %v346, %v345
      %348 = vrot.lane.b32.xlu0 %v301, 16
      %v349 = vpop.permute.xlu0 %348
      %350 = vrot.lane.b32.xlu0 %v302, 16
      %v351 = vpop.permute.xlu0 %350
      %v352 = vsel %vm261, %v349, %v351
      %v353 = vsel %vm261, %v351, %v349
      %354 = vrot.lane.b32.xlu0 %v301, 112
      %v355 = vpop.permute.xlu0 %354
      %356 = vrot.lane.b32.xlu0 %v302, 112
      %v357 = vpop.permute.xlu0 %356
      %v358 = vsel %vm313, %v355, %v357
      %v359 = vsel %vm313, %v357, %v355
      %v360 = vsel %vm318, %v358, %v353
      %v361 = vsel %vm319, %v359, %v352
      %v362 = vpack.c.bf16 %v361, %v360
      %v363 = vpack.c.bf16 %v296, %v295
      %364 = vst [vmem:[#allocation1] ss:$2 sm:$0xff] %v265
      %v365 = vld.sshfl [vmem:[#allocation1] sm:$0xff pattern:$0x75316420]
      %v366 = vld.sshfl [vmem:[#allocation1 + $0x8] sm:$0xff pattern:$0x75316420]
      %v369 = vpack.c.bf16 %v366, %v365
      %v370 = vpack.c.bf16 %v302, %v301
      %v371 = vsel %vm263, 1, 0
      %v372 = vsel %vm264, 1, 0
      %vm373 = vcmp.eq.s32.totalorder %v371, 1
      %vm374 = vcmp.eq.s32.totalorder %v372, 1
      %v375 = vsel %vm373, %v308, %v314
      %v376 = vsel %vm374, %v307, %v315
      %v377 = vpack.c.bf16 %v376, %v375
      %v378 = vsel %vm373, %v333, %v343
      %v379 = vsel %vm374, %v332, %v344
      %v380 = vpack.c.bf16 %v379, %v378
      %v381 = vsel %vm373, %v353, %v358
      %v382 = vsel %vm374, %v352, %v359
      %v383 = vpack.c.bf16 %v382, %v381
      %v385 = vunpack.c.l.b16 %v322
      %v386 = vunpack.c.h.b16 %v322
      %v387 = vpack.c.b16 %v385, %v385
      %v388 = vpack.c.b16 %v386, %v386
      %v390 = vunpack.c.l.b16 %v347
      %v391 = vunpack.c.h.b16 %v347
      %v392 = vpack.c.b16 %v390, %v390
      %v393 = vpack.c.b16 %v391, %v391
      %v394 = vrot.slane %v392, 6
      %v395 = vrot.slane %v393, 6
      %v397 = vunpack.c.l.b16 %v362
      %v398 = vunpack.c.h.b16 %v362
      %v399 = vpack.c.b16 %v397, %v397
      %v400 = vpack.c.b16 %v398, %v398
      %v402 = vunpack.c.l.b16 %v363
      %v403 = vunpack.c.h.b16 %v363
      %v404 = vpack.c.b16 %v402, %v402
      %v405 = vpack.c.b16 %v403, %v403
      %v406 = vrot.slane %v404, 2
      %v407 = vrot.slane %v405, 2
      %v409 = vunpack.c.l.b16 %v369
      %v410 = vunpack.c.h.b16 %v369
      %v411 = vpack.c.b16 %v409, %v409
      %v412 = vpack.c.b16 %v410, %v410
      %v414 = vunpack.c.l.b16 %v370
      %v415 = vunpack.c.h.b16 %v370
      %v416 = vpack.c.b16 %v414, %v414
      %v417 = vpack.c.b16 %v415, %v415
      %v418 = vrot.slane %v416, 6
      %v419 = vrot.slane %v417, 6
      %v421 = vunpack.c.l.b16 %v377
      %v422 = vunpack.c.h.b16 %v377
      %v423 = vpack.c.b16 %v421, %v421
      %v424 = vpack.c.b16 %v422, %v422
      %v426 = vunpack.c.l.b16 %v380
      %v427 = vunpack.c.h.b16 %v380
      %v428 = vpack.c.b16 %v426, %v426
      %v429 = vpack.c.b16 %v427, %v427
      %v430 = vrot.slane %v428, 2
      %v431 = vrot.slane %v429, 2
      %v433 = vunpack.c.l.b16 %v383
      %v434 = vunpack.c.h.b16 %v383
      %v435 = vpack.c.b16 %v433, %v433
      %v436 = vpack.c.b16 %v434, %v434
      %vm437 = vcmask 1041408
      %v440 = vsel %vm437, %v387, %v394
      %v443 = vsel %vm437, %v388, %v395
      %vm444 = vcmask 1043456
      %v446 = vsel %vm444, %v440, %v399
      %v448 = vsel %vm444, %v443, %v400
      %vm449 = vcmask 1045504
      %v451 = vsel %vm449, %v446, %v406
      %v454 = vsel %vm449, %v448, %v407
      %v458 = vsel %vm437, %v411, %v418
      %v461 = vsel %vm437, %v412, %v419
      %v463 = vsel %vm444, %v458, %v423
      %v465 = vsel %vm444, %v461, %v424
      %v467 = vsel %vm449, %v463, %v430
      %v470 = vsel %vm449, %v465, %v431
      %473 = vset.pattern.permute.xlu0 0
      %474 = vperm.xlu0 %473, %v228
      %v475 = vpop.permute.xlu0 %474
      %vm477 = vcmask 293888
      %v479 = vsel %vm477, %v226, 0
      %v482 = vsel %vm437, %v435, 0
      %v485 = vsel %vm437, %v436, 0
      %487 = vmatpush.bf16.msra.mxu0 0
      %488 = vmatpush.bf16.msra.mxu0 0
      %489 = vmatpush.bf16.msra.mxu0 0
      %490 = vmatpush.bf16.msra.mxu0 0
      %491 = vmatpush.bf16.msra.mxu0 0
      %492 = vmatpush.bf16.msra.mxu0 %v482
      %493 = vmatpush.bf16.msra.mxu0 %v467
      %494 = vmatpush.bf16.msra.mxu0 %v451
      %495 = vmatmul.bf16.gmra.mxu0 %v479
      %v496 = vpop.f32.mrf.mxu0
      %v497 = vadd.f32 %v475, %v496
      %v498 = vpop.f32.mrf.mxu0
      %499 = vdwg.mxu0
      %500 = vmatpush.bf16.msra.mxu0 0
      %501 = vmatpush.bf16.msra.mxu0 0
      %502 = vmatpush.bf16.msra.mxu0 0
      %503 = vmatpush.bf16.msra.mxu0 0
      %504 = vmatpush.bf16.msra.mxu0 0
      %505 = vmatpush.bf16.msra.mxu0 %v485
      %506 = vmatpush.bf16.msra.mxu0 %v470
      %507 = vmatpush.bf16.msra.mxu0 %v454
      %508 = vmatmul.bf16.gmra.mxu0 %v479
      %v509 = vpop.f32.mrf.mxu0
      %v510 = vadd.f32 %v475, %v509
      %v511 = vpop.f32.mrf.mxu0
      %512 = vdwg.mxu0
      %v513 = vsel %vm444, %v497, 0.0
      %v514 = vsel %vm444, %v510, 0.0
      %v515 = vadd.f32 %v513, %v514
      %516 = vadd.xlane.f32.xlu0 %v515
      %v517 = vpop.xlane.xlu0 %516
      %v518 = vmul.f32 %v497, %v497
      %v519 = vmul.f32 %v510, %v510
      %v520 = vsel %vm444, %v518, 0.0
      %v521 = vsel %vm444, %v519, 0.0
      %v522 = vadd.f32 %v520, %v521
      %523 = vadd.xlane.f32.xlu0 %v522
      %v524 = vpop.xlane.xlu0 %523
      %v525 = vmul.f32 %v517, 0.00390625
      %v526 = vmul.f32 %v524, 0.00390625
      %v527 = vmul.f32 %v525, %v525
      %v528 = vsub.f32 %v526, %v527
      %v529 = vmax.f32 %v528, 0.0
      %v530 = vsub.f32 %v497, %v525
      %v531 = vsub.f32 %v510, %v525
      %v532 = vadd.f32 %v529, 1e-05
      %v533 = vrsqrt.pop %v532
      %v534 = vmul.f32 %v533, %v532
      %v535 = vmul.f32 %v534, %v533
      %v536 = vmul.f32 0.5, %v535
      %v537 = vsub.f32 1.5, %v536
      %v538 = vmul.f32 %v533, %v537
      %vm539 = vweird.f32 %v532
      %vm540 = vweird.f32 %v533
      %vm541 = vmor %vm539, %vm540
      %v542 = vsel %vm541, %v533, %v538
      %v543 = vmul.f32 %v530, %v542
      %v544 = vmul.f32 %v531, %v542
      %v545 = vmax.f32 %v543, 0.0
      %v546 = vmax.f32 %v544, 0.0
      %547 = vrot.lane.b32.xlu0 %v545, 1
      %v548 = vpop.permute.xlu0 %547
      %549 = vrot.lane.b32.xlu0 %v546, 1
      %v550 = vpop.permute.xlu0 %549
      %v551 = vsel %vm276, %v548, %v550
      %v552 = vsel %vm276, %v550, %v548
      %553 = vrot.lane.b32.xlu0 %v545, 127
      %v554 = vpop.permute.xlu0 %553
      %555 = vrot.lane.b32.xlu0 %v546, 127
      %v556 = vpop.permute.xlu0 %555
      %v557 = vsel %vm288, %v554, %v556
      %v558 = vsel %vm288, %v556, %v554
      %v559 = vsel %vm293, %v557, %v552
      %v560 = vsel %vm294, %v558, %v551
      %v561 = vsel %vm299, %v552, %v557
      %v562 = vsel %vm300, %v551, %v558
      %563 = vrot.lane.b32.xlu0 %v559, 16
      %v564 = vpop.permute.xlu0 %563
      %565 = vrot.lane.b32.xlu0 %v560, 16
      %v566 = vpop.permute.xlu0 %565
      %v567 = vsel %vm261, %v564, %v566
      %v568 = vsel %vm261, %v566, %v564
      %569 = vrot.lane.b32.xlu0 %v559, 112
      %v570 = vpop.permute.xlu0 %569
      %571 = vrot.lane.b32.xlu0 %v560, 112
      %v572 = vpop.permute.xlu0 %571
      %v573 = vsel %vm313, %v570, %v572
      %v574 = vsel %vm313, %v572, %v570
      %v575 = vsel %vm318, %v573, %v568
      %v576 = vsel %vm319, %v574, %v567
      %v577 = vpack.c.bf16 %v576, %v575
      %578 = vrot.lane.b32.xlu0 %v545, 16
      %v579 = vpop.permute.xlu0 %578
      %580 = vrot.lane.b32.xlu0 %v546, 16
      %v581 = vpop.permute.xlu0 %580
      %v582 = vsel %vm261, %v579, %v581
      %v583 = vsel %vm261, %v581, %v579
      %584 = vrot.lane.b32.xlu0 %v545, 112
      %v585 = vpop.permute.xlu0 %584
      %586 = vrot.lane.b32.xlu0 %v546, 112
      %v587 = vpop.permute.xlu0 %586
      %v588 = vsel %vm313, %v585, %v587
      %v589 = vsel %vm313, %v587, %v585
      %v590 = vsel %vm318, %v588, %v583
      %v591 = vsel %vm319, %v589, %v582
      %v592 = vpack.c.bf16 %v591, %v590
      %593 = vrot.lane.b32.xlu0 %v561, 16
      %v594 = vpop.permute.xlu0 %593
      %595 = vrot.lane.b32.xlu0 %v562, 16
      %v596 = vpop.permute.xlu0 %595
      %v597 = vsel %vm261, %v594, %v596
      %v598 = vsel %vm261, %v596, %v594
      %599 = vrot.lane.b32.xlu0 %v561, 112
      %v600 = vpop.permute.xlu0 %599
      %601 = vrot.lane.b32.xlu0 %v562, 112
      %v602 = vpop.permute.xlu0 %601
      %v603 = vsel %vm313, %v600, %v602
      %v604 = vsel %vm313, %v602, %v600
      %v605 = vsel %vm318, %v603, %v598
      %v606 = vsel %vm319, %v604, %v597
      %v607 = vpack.c.bf16 %v606, %v605
      %v608 = vpack.c.bf16 %v560, %v559
      %v609 = vpack.c.bf16 %v546, %v545
      %v610 = vpack.c.bf16 %v562, %v561
      %v611 = vsel %vm373, %v568, %v573
      %v612 = vsel %vm374, %v567, %v574
      %v613 = vpack.c.bf16 %v612, %v611
      %v614 = vsel %vm373, %v583, %v588
      %v615 = vsel %vm374, %v582, %v589
      %v616 = vpack.c.bf16 %v615, %v614
      %v617 = vsel %vm373, %v598, %v603
      %v618 = vsel %vm374, %v597, %v604
      %v619 = vpack.c.bf16 %v618, %v617
      %v621 = vunpack.c.l.b16 %v577
      %v622 = vunpack.c.h.b16 %v577
      %v623 = vpack.c.b16 %v621, %v621
      %v624 = vpack.c.b16 %v622, %v622
      %v626 = vunpack.c.l.b16 %v592
      %v627 = vunpack.c.h.b16 %v592
      %v628 = vpack.c.b16 %v626, %v626
      %v629 = vpack.c.b16 %v627, %v627
      %v630 = vrot.slane %v628, 6
      %v631 = vrot.slane %v629, 6
      %v633 = vunpack.c.l.b16 %v607
      %v634 = vunpack.c.h.b16 %v607
      %v635 = vpack.c.b16 %v633, %v633
      %v636 = vpack.c.b16 %v634, %v634
      %v638 = vunpack.c.l.b16 %v608
      %v639 = vunpack.c.h.b16 %v608
      %v640 = vpack.c.b16 %v638, %v638
      %v641 = vpack.c.b16 %v639, %v639
      %v642 = vrot.slane %v640, 2
      %v643 = vrot.slane %v641, 2
      %v645 = vunpack.c.l.b16 %v609
      %v646 = vunpack.c.h.b16 %v609
      %v647 = vpack.c.b16 %v645, %v645
      %v648 = vpack.c.b16 %v646, %v646
      %v650 = vunpack.c.l.b16 %v610
      %v651 = vunpack.c.h.b16 %v610
      %v652 = vpack.c.b16 %v650, %v650
      %v653 = vpack.c.b16 %v651, %v651
      %v654 = vrot.slane %v652, 6
      %v655 = vrot.slane %v653, 6
      %v657 = vunpack.c.l.b16 %v613
      %v658 = vunpack.c.h.b16 %v613
      %v659 = vpack.c.b16 %v657, %v657
      %v660 = vpack.c.b16 %v658, %v658
      %v662 = vunpack.c.l.b16 %v616
      %v663 = vunpack.c.h.b16 %v616
      %v664 = vpack.c.b16 %v662, %v662
      %v665 = vpack.c.b16 %v663, %v663
      %v666 = vrot.slane %v664, 2
      %v667 = vrot.slane %v665, 2
      %v669 = vunpack.c.l.b16 %v619
      %v670 = vunpack.c.h.b16 %v619
      %v671 = vpack.c.b16 %v669, %v669
      %v672 = vpack.c.b16 %v670, %v670
      %v675 = vsel %vm437, %v623, %v630
      %v678 = vsel %vm437, %v624, %v631
      %v680 = vsel %vm444, %v675, %v635
      %v682 = vsel %vm444, %v678, %v636
      %v684 = vsel %vm449, %v680, %v642
      %v687 = vsel %vm449, %v682, %v643
      %v691 = vsel %vm437, %v647, %v654
      %v694 = vsel %vm437, %v648, %v655
      %v696 = vsel %vm444, %v691, %v659
      %v698 = vsel %vm444, %v694, %v660
      %v700 = vsel %vm449, %v696, %v666
      %v703 = vsel %vm449, %v698, %v667
      %706 = vset.pattern.permute.xlu0 0
      %707 = vperm.xlu0 %706, %v229
      %v708 = vpop.permute.xlu0 %707
      %v711 = vsel %vm477, %v227, 0
      %v714 = vsel %vm437, %v671, 0
      %v717 = vsel %vm437, %v672, 0
      %719 = vmatpush.bf16.msra.mxu0 0
      %720 = vmatpush.bf16.msra.mxu0 0
      %721 = vmatpush.bf16.msra.mxu0 0
      %722 = vmatpush.bf16.msra.mxu0 0
      %723 = vmatpush.bf16.msra.mxu0 0
      %724 = vmatpush.bf16.msra.mxu0 %v714
      %725 = vmatpush.bf16.msra.mxu0 %v700
      %726 = vmatpush.bf16.msra.mxu0 %v684
      %727 = vmatmul.bf16.gmra.mxu0 %v711
      %v728 = vpop.f32.mrf.mxu0
      %v729 = vadd.f32 %v708, %v728
      %v730 = vpop.f32.mrf.mxu0
      %731 = vdwg.mxu0
      %732 = vmatpush.bf16.msra.mxu0 0
      %733 = vmatpush.bf16.msra.mxu0 0
      %734 = vmatpush.bf16.msra.mxu0 0
      %735 = vmatpush.bf16.msra.mxu0 0
      %736 = vmatpush.bf16.msra.mxu0 0
      %737 = vmatpush.bf16.msra.mxu0 %v717
      %738 = vmatpush.bf16.msra.mxu0 %v703
      %739 = vmatpush.bf16.msra.mxu0 %v687
      %740 = vmatmul.bf16.gmra.mxu0 %v711
      %v741 = vpop.f32.mrf.mxu0
      %v742 = vadd.f32 %v708, %v741
      %v743 = vpop.f32.mrf.mxu0
      %744 = vdwg.mxu0
      %v745 = vsel %vm444, %v729, 0.0
      %v746 = vsel %vm444, %v742, 0.0
      %v747 = vadd.f32 %v745, %v746
      %748 = vadd.xlane.f32.xlu0 %v747
      %v749 = vpop.xlane.xlu0 %748
      %v750 = vmul.f32 %v729, %v729
      %v751 = vmul.f32 %v742, %v742
      %v752 = vsel %vm444, %v750, 0.0
      %v753 = vsel %vm444, %v751, 0.0
      %v754 = vadd.f32 %v752, %v753
      %755 = vadd.xlane.f32.xlu0 %v754
      %v756 = vpop.xlane.xlu0 %755
      %v757 = vmul.f32 %v749, 0.00390625
      %v758 = vmul.f32 %v756, 0.00390625
      %v759 = vmul.f32 %v757, %v757
      %v760 = vsub.f32 %v758, %v759
      %v761 = vmax.f32 %v760, 0.0
      %v762 = vsub.f32 %v729, %v757
      %v763 = vsub.f32 %v742, %v757
      %v764 = vadd.f32 %v761, 1e-05
      %v765 = vrsqrt.pop %v764
      %v766 = vmul.f32 %v765, %v764
      %v767 = vmul.f32 %v766, %v765
      %v768 = vmul.f32 0.5, %v767
      %v769 = vsub.f32 1.5, %v768
      %v770 = vmul.f32 %v765, %v769
      %vm771 = vweird.f32 %v764
      %vm772 = vweird.f32 %v765
      %vm773 = vmor %vm771, %vm772
      %v774 = vsel %vm773, %v765, %v770
      %v775 = vmul.f32 %v762, %v774
      %v776 = vmul.f32 %v763, %v774
      %v779 = vrot.slane %v776, 4
      %v780 = vsel %vm444, %v775, %v779
      %v782 = vadd.f32 %v265, %v780
      %783 = vst [vmem:[%s224] sm:$0xff] %v782
      %p784 = scmp.lt.s32.totalorder %s16, 1
      %s785 = scalar_select %p784, %s16, 1
      %s786 = smul.addr %s785, 2
      %s787 = smul.addr %s786, 4
      %s788 = scalar_lea.vmem %s5, %s787
      // Predicated region
      $region41: #{resnet_block_nchw.1} parent=39 // pred_check
        %p789 = pneg %p144
      $region42: #{resnet_block_nchw.1} parent=39 // pred_check_branch
        %791 = sbr.rel (%p789) target = $region44
      $region43: #{resnet_block_nchw.1} parent=39 // pred_region
        _
      $region44: #{resnet_block_nchw.1} parent=39 // pred_fallthru
        _
    $region40: #{resnet_block_nchw.1} parent=5 // pred_fallthru
      _
    %p792 = scmp.le.s32.totalorder 2, %s11
    // Predicated region
    $region45: #{resnet_block_nchw.1} parent=5 // pred_check
      %p793 = pneg %p792
    $region46: #{resnet_block_nchw.1} parent=5 // pred_check_branch
      %795 = sbr.rel (%p793) target = $region48
    $region47: #{resnet_block_nchw.1} parent=5 // pred_region
      %s796 = ssub.s32 %s11, 2
      // Predicated region
      $region49: #{resnet_block_nchw.1} parent=47 // pred_check
        %p797 = pneg %p150
      $region50: #{resnet_block_nchw.1} parent=47 // pred_check_branch
        %799 = sbr.rel (%p797) target = $region52
      $region51: #{resnet_block_nchw.1} parent=47 // pred_region
        %p800 = scmp.lt.s32.totalorder %s17, 1
        %s801 = scalar_select %p800, %s17, 1
        %s802 = smul.addr %s801, 2
        %s803 = smul.addr %s802, 4
        %s804 = scalar_lea.vmem %s5, %s803
      $region52: #{resnet_block_nchw.1} parent=47 // pred_fallthru
        _
    $region48: #{resnet_block_nchw.1} parent=5 // pred_fallthru
      _
  $region6: #{resnet_block_nchw.1} parent=0 // loop_footer
    %s15 = sadd.s32 1, %s11
  $region7: #{resnet_block_nchw.1} parent=0 // loop_footer_branch
    %10 = sbr.rel target = $region3
  $region8: #{resnet_block_nchw.1} parent=0 // loop_exit
    _

// kernel: resnet_block_nchw.1
$region0: #{resnet_block_nchw.1}
  #allocation0 [shape = 'u32[]', space=smem, size = 0x4, offset = 0x4, fixed_abs, tag = 'smem constant byte address 0x4 - core index']
  #allocation1 [shape = 'u32[72,128]{1,0:T(1,128)}', space=vmem, size = 0x9000, scoped, tag = 'internal scratch']
  %s0 = inlined_call_operand.vmem [shape: f32[2,4,256], index: 0, kind: input, shape index: {}]
  %s1 = inlined_call_operand.vmem [shape: bf16[4,36], index: 1, kind: input, shape index: {}]
  %s2 = inlined_call_operand.vmem [shape: f32[4,1], index: 2, kind: input, shape index: {}]
  %s3 = inlined_call_operand.vmem [shape: bf16[4,36], index: 3, kind: input, shape index: {}]
  %s4 = inlined_call_operand.vmem [shape: f32[4,1], index: 4, kind: input, shape index: {}]
  %s5 = inlined_call_operand.vmem [shape: f32[2,4,256], index: 5, kind: output, shape index: {}]
  %s6 = sld [smem:[#allocation0]]
  $region53: #{resnet_block_nchw.1} parent=0
    _
  %s8 = ssub.s32 1, %s6
  %s9 = scalar_select 0, %s8, %s6
  loop: start=0, step=1, limit=4
  $region2: #{resnet_block_nchw.1} parent=0 // loop_pre_header
    _
  $region3: #{resnet_block_nchw.1} parent=0 // loop_header
    %s11 = sphi 0, %s15
    %p12 = scmp.ge.s32.totalorder %s11, 4
    %s21 = sphi 0, %s23
    %s24 = sphi 0, %s21
    %s25 = sphi 0, %s24
    %s41 = sphi 0, %s25
    %s45 = sphi 0, %s45
    %s47 = sphi 0, %s45
    %s48 = sphi 0, %s47
    %s62 = sphi 0, %s48
    %s66 = sphi 0, %s66
    %s68 = sphi 0, %s66
    %s69 = sphi 0, %s68
    %s83 = sphi 0, %s69
    %s87 = sphi 0, %s87
    %s89 = sphi 0, %s87
    %s90 = sphi 0, %s89
    %s104 = sphi 0, %s90
    %s108 = sphi 0, %s108
    %s110 = sphi 0, %s108
    %s111 = sphi 0, %s110
    %s125 = sphi 0, %s111
    %s131 = sphi 0, %s133
    %s134 = sphi 0, %s131
    %s135 = sphi 0, %s134
    %s151 = sphi 0, %s135
  $region4: #{resnet_block_nchw.1} parent=0 // loop_header_branch
    %14 = sbr.rel (%p12) target = $region8
  $region5: #{resnet_block_nchw.1} parent=0 // loop_body
    %s16 = ssub.s32 %s11, 1
    %s17 = ssub.s32 %s11, 2
    %s18 = sadd.s32 %s11, 1
    %s19 = ssub.s32 %s11, %s18
    %p20 = scmp.eq.s32.totalorder %s19, 0
    %s22 = sadd.s32 %s21, 1
    %s23 = scalar_select %p20, %s21, %s22
    %p26 = pneg %p20
    %p27 = scmp.eq.s32.totalorder %s11, 1
    %p28 = por %p26, %p27
    %p29 = scmp.ne.s32.totalorder %s21, %s24
    %p30 = scmp.eq.s32.totalorder %s11, 0
    %p31 = por %p29, %p30
    %p32 = scmp.ne.s32.totalorder %s21, %s24
    %p33 = scmp.eq.s32.totalorder %s16, 1
    %p34 = por %p32, %p33
    %p35 = scmp.ne.s32.totalorder %s24, %s25
    %p36 = scmp.eq.s32.totalorder %s16, 0
    %p37 = por %p35, %p36
    %p38 = scmp.ne.s32.totalorder %s24, %s25
    %p39 = scmp.eq.s32.totalorder %s17, 1
    %p40 = por %p38, %p39
    %p42 = scmp.ne.s32.totalorder %s25, %s41
    %p43 = scmp.eq.s32.totalorder %s17, 0
    %p44 = por %p42, %p43
    %s46 = sadd.s32 %s45, 1
    %p49 = scmp.eq.s32.totalorder %s11, 1
    %p50 = scmp.ne.s32.totalorder %s45, %s47
    %p51 = scmp.eq.s32.totalorder %s11, 0
    %p52 = por %p50, %p51
    %p53 = scmp.ne.s32.totalorder %s45, %s47
    %p54 = scmp.eq.s32.totalorder %s16, 1
    %p55 = por %p53, %p54
    %p56 = scmp.ne.s32.totalorder %s47, %s48
    %p57 = scmp.eq.s32.totalorder %s16, 0
    %p58 = por %p56, %p57
    %p59 = scmp.ne.s32.totalorder %s47, %s48
    %p60 = scmp.eq.s32.totalorder %s17, 1
    %p61 = por %p59, %p60
    %p63 = scmp.ne.s32.totalorder %s48, %s62
    %p64 = scmp.eq.s32.totalorder %s17, 0
    %p65 = por %p63, %p64
    %s67 = sadd.s32 %s66, 1
    %p70 = scmp.eq.s32.totalorder %s11, 1
    %p71 = scmp.ne.s32.totalorder %s66, %s68
    %p72 = scmp.eq.s32.totalorder %s11, 0
    %p73 = por %p71, %p72
    %p74 = scmp.ne.s32.totalorder %s66, %s68
    %p75 = scmp.eq.s32.totalorder %s16, 1
    %p76 = por %p74, %p75
    %p77 = scmp.ne.s32.totalorder %s68, %s69
    %p78 = scmp.eq.s32.totalorder %s16, 0
    %p79 = por %p77, %p78
    %p80 = scmp.ne.s32.totalorder %s68, %s69
    %p81 = scmp.eq.s32.totalorder %s17, 1
    %p82 = por %p80, %p81
    %p84 = scmp.ne.s32.totalorder %s69, %s83
    %p85 = scmp.eq.s32.totalorder %s17, 0
    %p86 = por %p84, %p85
    %s88 = sadd.s32 %s87, 1
    %p91 = scmp.eq.s32.totalorder %s11, 1
    %p92 = scmp.ne.s32.totalorder %s87, %s89
    %p93 = scmp.eq.s32.totalorder %s11, 0
    %p94 = por %p92, %p93
    %p95 = scmp.ne.s32.totalorder %s87, %s89
    %p96 = scmp.eq.s32.totalorder %s16, 1
    %p97 = por %p95, %p96
    %p98 = scmp.ne.s32.totalorder %s89, %s90
    %p99 = scmp.eq.s32.totalorder %s16, 0
    %p100 = por %p98, %p99
    %p101 = scmp.ne.s32.totalorder %s89, %s90
    %p102 = scmp.eq.s32.totalorder %s17, 1
    %p103 = por %p101, %p102
    %p105 = scmp.ne.s32.totalorder %s90, %s104
    %p106 = scmp.eq.s32.totalorder %s17, 0
    %p107 = por %p105, %p106
    %s109 = sadd.s32 %s108, 1
    %p112 = scmp.eq.s32.totalorder %s11, 1
    %p113 = scmp.ne.s32.totalorder %s108, %s110
    %p114 = scmp.eq.s32.totalorder %s11, 0
    %p115 = por %p113, %p114
    %p116 = scmp.ne.s32.totalorder %s108, %s110
    %p117 = scmp.eq.s32.totalorder %s16, 1
    %p118 = por %p116, %p117
    %p119 = scmp.ne.s32.totalorder %s110, %s111
    %p120 = scmp.eq.s32.totalorder %s16, 0
    %p121 = por %p119, %p120
    %p122 = scmp.ne.s32.totalorder %s110, %s111
    %p123 = scmp.eq.s32.totalorder %s17, 1
    %p124 = por %p122, %p123
    %p126 = scmp.ne.s32.totalorder %s111, %s125
    %p127 = scmp.eq.s32.totalorder %s17, 0
    %p128 = por %p126, %p127
    %s129 = ssub.s32 %s11, %s18
    %p130 = scmp.eq.s32.totalorder %s129, 0
    %s132 = sadd.s32 %s131, 1
    %s133 = scalar_select %p130, %s131, %s132
    %p136 = pneg %p130
    %p137 = scmp.eq.s32.totalorder %s11, 1
    %p138 = por %p136, %p137
    %p139 = scmp.ne.s32.totalorder %s131, %s134
    %p140 = scmp.eq.s32.totalorder %s11, 0
    %p141 = por %p139, %p140
    %p142 = scmp.ne.s32.totalorder %s131, %s134
    %p143 = scmp.eq.s32.totalorder %s16, 1
    %p144 = por %p142, %p143
    %p145 = scmp.ne.s32.totalorder %s134, %s135
    %p146 = scmp.eq.s32.totalorder %s16, 0
    %p147 = por %p145, %p146
    %p148 = scmp.ne.s32.totalorder %s134, %s135
    %p149 = scmp.eq.s32.totalorder %s17, 1
    %p150 = por %p148, %p149
    %p152 = scmp.ne.s32.totalorder %s135, %s151
    %p153 = scmp.eq.s32.totalorder %s17, 0
    %p154 = por %p152, %p153
    %p155 = scmp.le.s32.totalorder 1, %s11
    %p156 = scmp.lt.s32.totalorder %s11, 3
    %p157 = pnand %p155, %p156
    %p158 = pneg %p157
    // Predicated region
    $region9: #{resnet_block_nchw.1} parent=5 // pred_check
      _
    $region10: #{resnet_block_nchw.1} parent=5 // pred_check_branch
      %160 = sbr.rel (%p157) target = $region12
    $region11: #{resnet_block_nchw.1} parent=5 // pred_region
      %s161 = ssub.s32 %s11, 1
      // Predicated region
      $region13: #{resnet_block_nchw.1} parent=11 // pred_check
        %p162 = pneg %p58
      $region14: #{resnet_block_nchw.1} parent=11 // pred_check_branch
        %164 = sbr.rel (%p162) target = $region16
      $region15: #{resnet_block_nchw.1} parent=11 // pred_region
        _
      $region16: #{resnet_block_nchw.1} parent=11 // pred_fallthru
        _
      // Predicated region
      $region17: #{resnet_block_nchw.1} parent=11 // pred_check
        %p165 = pneg %p79
      $region18: #{resnet_block_nchw.1} parent=11 // pred_check_branch
        %167 = sbr.rel (%p165) target = $region20
      $region19: #{resnet_block_nchw.1} parent=11 // pred_region
        _
      $region20: #{resnet_block_nchw.1} parent=11 // pred_fallthru
        _
      // Predicated region
      $region21: #{resnet_block_nchw.1} parent=11 // pred_check
        %p168 = pneg %p100
      $region22: #{resnet_block_nchw.1} parent=11 // pred_check_branch
        %170 = sbr.rel (%p168) target = $region24
      $region23: #{resnet_block_nchw.1} parent=11 // pred_region
        _
      $region24: #{resnet_block_nchw.1} parent=11 // pred_fallthru
        _
      // Predicated region
      $region25: #{resnet_block_nchw.1} parent=11 // pred_check
        %p171 = pneg %p121
      $region26: #{resnet_block_nchw.1} parent=11 // pred_check_branch
        %173 = sbr.rel (%p171) target = $region28
      $region27: #{resnet_block_nchw.1} parent=11 // pred_region
        _
      $region28: #{resnet_block_nchw.1} parent=11 // pred_fallthru
        _
    $region12: #{resnet_block_nchw.1} parent=5 // pred_fallthru
      _
    %p174 = scmp.lt.s32.totalorder %s11, 2
    // Predicated region
    $region29: #{resnet_block_nchw.1} parent=5 // pred_check
      %p175 = pneg %p174
    $region30: #{resnet_block_nchw.1} parent=5 // pred_check_branch
      %177 = sbr.rel (%p175) target = $region32
    $region31: #{resnet_block_nchw.1} parent=5 // pred_region
      // Predicated region
      $region33: #{resnet_block_nchw.1} parent=31 // pred_check
        %p178 = pneg %p31
      $region34: #{resnet_block_nchw.1} parent=31 // pred_check_branch
        %180 = sbr.rel (%p178) target = $region36
      $region35: #{resnet_block_nchw.1} parent=31 // pred_region
        %p181 = scmp.lt.s32.totalorder %s11, 1
        %s182 = scalar_select %p181, %s11, 1
        %s183 = smul.addr %s182, 2
        %s184 = smul.addr %s183, 4
        %s185 = scalar_lea.vmem %s0, %s184
      $region36: #{resnet_block_nchw.1} parent=31 // pred_fallthru
        _
    $region32: #{resnet_block_nchw.1} parent=5 // pred_fallthru
      _
    %p186 = scmp.le.s32.totalorder 1, %s11
    %p187 = scmp.lt.s32.totalorder %s11, 3
    %p188 = pnand %p186, %p187
    %p189 = pneg %p188
    // Predicated region
    $region37: #{resnet_block_nchw.1} parent=5 // pred_check
      _
    $region38: #{resnet_block_nchw.1} parent=5 // pred_check_branch
      %191 = sbr.rel (%p188) target = $region40
    $region39: #{resnet_block_nchw.1} parent=5 // pred_region
      %s192 = ssub.s32 %s11, 1
      %p193 = scmp.lt.s32.totalorder %s16, 1
      %s194 = scalar_select %p193, %s16, 1
      %s195 = smul.addr %s194, 2
      %s196 = smul.addr %s195, 4
      %s197 = scalar_lea.vmem %s0, %s196
      %p198 = pneg %p37
      %p199 = pneg %p34
      %p200 = pneg %p58
      %p201 = pneg %p55
      %p202 = pneg %p79
      %p203 = pneg %p76
      %p204 = pneg %p100
      %p205 = pneg %p97
      %p206 = pneg %p121
      %p207 = pneg %p118
      %p208 = pneg %p147
      %p209 = pneg %p144
      %p210 = scmp.lt.s32.totalorder %s16, 1
      %s211 = scalar_select %p210, %s16, 1
      %s212 = smul.addr %s211, 2
      %s213 = smul.addr %s212, 4
      %s214 = scalar_lea.vmem %s5, %s213
      %p215 = scmp.lt.s32.totalorder %s16, 1
      %s216 = scalar_select %p215, %s16, 1
      %s217 = smul.addr %s216, 2
      %s218 = smul.addr %s217, 4
      %s219 = scalar_lea.vmem %s0, %s218
      %p220 = scmp.lt.s32.totalorder %s16, 1
      %s221 = scalar_select %p220, %s16, 1
      %s222 = smul.addr %s221, 2
      %s223 = smul.addr %s222, 4
      %s224 = scalar_lea.vmem %s5, %s223
      %v226 = vld [vmem:[%s1] sm:$0x3]
      %v227 = vld [vmem:[%s3] sm:$0x3]
      %v228 = vld [vmem:[%s2] sm:$0xf]
      %v229 = vld [vmem:[%s4] sm:$0xf]
      %v230 = vlaneseq
      %v231 = vand.u32 %v230, 127
      %v232 = vadd.s32 %v231, 128
      %vm233 = vcmp.lt.s32.totalorder %v231, 0
      %v234 = vsub.s32 0, %v231
      %v235 = vsel %vm233, %v234, %v231
      %v236 = vshrl.u32 %v235, 4
      %v237 = vand.u32 %v235, 15
      %v238 = vsub.s32 0, %v237
      %v239 = vsel %vm233, %v238, %v237
      %vm240 = vcmp.lt.s32.totalorder %v232, 0
      %v241 = vsub.s32 0, %v232
      %v242 = vsel %vm240, %v241, %v232
      %v243 = vshrl.u32 %v242, 4
      %v244 = vand.u32 %v242, 15
      %v245 = vsub.s32 0, %v244
      %v246 = vsel %vm240, %v245, %v244
      %vm247 = vcmp.ne.s32.totalorder %v239, 0
      %vm248 = vcmp.ne.s32.totalorder %v246, 0
      %vm249 = vcmp.lt.s32.totalorder %v239, 0
      %vm250 = vcmp.lt.s32.totalorder %v246, 0
      %vm251 = vmand %vm249, %vm247
      %vm252 = vmand %vm250, %vm248
      %v253 = vadd.s32 %v239, 16
      %v254 = vadd.s32 %v246, 16
      %v255 = vsel %vm251, %v253, %v239
      %v256 = vsel %vm252, %v254, %v246
      %vm257 = vcmp.eq.s32.totalorder %v255, 0
      %vm258 = vcmp.eq.s32.totalorder %v256, 0
      %vm259 = vcmp.eq.s32.totalorder %v255, 15
      %vm260 = vcmp.eq.s32.totalorder %v256, 15
      %vm261 = vcmp.lt.s32.totalorder %v231, 16
      %vm262 = vcmp.lt.s32.totalorder %v232, 16
      %vm263 = vcmp.ge.s32.totalorder %v231, 240
      %vm264 = vcmp.ge.s32.totalorder %v232, 240
      %v265 = vld [vmem:[%s219] sm:$0xff]
      %267 = vst [vmem:[#allocation1] ss:$2 sm:$0xff] %v265
      %v268 = vld.sshfl [vmem:[#allocation1] sm:$0xff pattern:$0x75316420]
      %v269 = vld.sshfl [vmem:[#allocation1 + $0x8] sm:$0xff pattern:$0x75316420]
      %272 = vrot.lane.b32.xlu0 %v268, 1
      %v273 = vpop.permute.xlu0 %272
      %274 = vrot.lane.b32.xlu0 %v269, 1
      %v275 = vpop.permute.xlu0 %274
      %vm276 = vcmp.lt.s32.totalorder %v231, 1
      %v277 = vsel %vm276, %v273, %v275
      %v278 = vsel %vm276, %v275, %v273
      %279 = vst [vmem:[#allocation1] ss:$2 sm:$0xff] %v265
      %v280 = vld.sshfl [vmem:[#allocation1] sm:$0xff pattern:$0x75316420]
      %v281 = vld.sshfl [vmem:[#allocation1 + $0x8] sm:$0xff pattern:$0x75316420]
      %284 = vrot.lane.b32.xlu0 %v280, 127
      %v285 = vpop.permute.xlu0 %284
      %286 = vrot.lane.b32.xlu0 %v281, 127
      %v287 = vpop.permute.xlu0 %286
      %vm288 = vcmp.lt.s32.totalorder %v231, 127
      %v289 = vsel %vm288, %v285, %v287
      %v290 = vsel %vm288, %v287, %v285
      %v291 = vsel %vm257, 1, 0
      %v292 = vsel %vm258, 1, 0
      %vm293 = vcmp.eq.s32.totalorder %v291, 1
      %vm294 = vcmp.eq.s32.totalorder %v292, 1
      %v295 = vsel %vm293, %v289, %v278
      %v296 = vsel %vm294, %v290, %v277
      %v297 = vsel %vm259, 1, 0
      %v298 = vsel %vm260, 1, 0
      %vm299 = vcmp.eq.s32.totalorder %v297, 1
      %vm300 = vcmp.eq.s32.totalorder %v298, 1
      %v301 = vsel %vm299, %v278, %v289
      %v302 = vsel %vm300, %v277, %v290
      %303 = vrot.lane.b32.xlu0 %v295, 16
      %v304 = vpop.permute.xlu0 %303
      %305 = vrot.lane.b32.xlu0 %v296, 16
      %v306 = vpop.permute.xlu0 %305
      %v307 = vsel %vm261, %v304, %v306
      %v308 = vsel %vm261, %v306, %v304
      %309 = vrot.lane.b32.xlu0 %v295, 112
      %v310 = vpop.permute.xlu0 %309
      %311 = vrot.lane.b32.xlu0 %v296, 112
      %v312 = vpop.permute.xlu0 %311
      %vm313 = vcmp.lt.s32.totalorder %v231, 112
      %v314 = vsel %vm313, %v310, %v312
      %v315 = vsel %vm313, %v312, %v310
      %v316 = vsel %vm261, 1, 0
      %v317 = vsel %vm262, 1, 0
      %vm318 = vcmp.eq.s32.totalorder %v316, 1
      %vm319 = vcmp.eq.s32.totalorder %v317, 1
      %v320 = vsel %vm318, %v314, %v308
      %v321 = vsel %vm319, %v315, %v307
      %v322 = vpack.c.bf16 %v321, %v320
      %323 = vst [vmem:[#allocation1] ss:$2 sm:$0xff] %v265
      %v324 = vld.sshfl [vmem:[#allocation1] sm:$0xff pattern:$0x75316420]
      %v325 = vld.sshfl [vmem:[#allocation1 + $0x8] sm:$0xff pattern:$0x75316420]
      %328 = vrot.lane.b32.xlu0 %v324, 16
      %v329 = vpop.permute.xlu0 %328
      %330 = vrot.lane.b32.xlu0 %v325, 16
      %v331 = vpop.permute.xlu0 %330
      %v332 = vsel %vm261, %v329, %v331
      %v333 = vsel %vm261, %v331, %v329
      %334 = vst [vmem:[#allocation1] ss:$2 sm:$0xff] %v265
      %v335 = vld.sshfl [vmem:[#allocation1] sm:$0xff pattern:$0x75316420]
      %v336 = vld.sshfl [vmem:[#allocation1 + $0x8] sm:$0xff pattern:$0x75316420]
      %339 = vrot.lane.b32.xlu0 %v335, 112
      %v340 = vpop.permute.xlu0 %339
      %341 = vrot.lane.b32.xlu0 %v336, 112
      %v342 = vpop.permute.xlu0 %341
      %v343 = vsel %vm313, %v340, %v342
      %v344 = vsel %vm313, %v342, %v340
      %v345 = vsel %vm318, %v343, %v333
      %v346 = vsel %vm319, %v344, %v332
      %v347 = vpack.c.bf16 %v346, %v345
      %348 = vrot.lane.b32.xlu0 %v301, 16
      %v349 = vpop.permute.xlu0 %348
      %350 = vrot.lane.b32.xlu0 %v302, 16
      %v351 = vpop.permute.xlu0 %350
      %v352 = vsel %vm261, %v349, %v351
      %v353 = vsel %vm261, %v351, %v349
      %354 = vrot.lane.b32.xlu0 %v301, 112
      %v355 = vpop.permute.xlu0 %354
      %356 = vrot.lane.b32.xlu0 %v302, 112
      %v357 = vpop.permute.xlu0 %356
      %v358 = vsel %vm313, %v355, %v357
      %v359 = vsel %vm313, %v357, %v355
      %v360 = vsel %vm318, %v358, %v353
      %v361 = vsel %vm319, %v359, %v352
      %v362 = vpack.c.bf16 %v361, %v360
      %v363 = vpack.c.bf16 %v296, %v295
      %364 = vst [vmem:[#allocation1] ss:$2 sm:$0xff] %v265
      %v365 = vld.sshfl [vmem:[#allocation1] sm:$0xff pattern:$0x75316420]
      %v366 = vld.sshfl [vmem:[#allocation1 + $0x8] sm:$0xff pattern:$0x75316420]
      %v369 = vpack.c.bf16 %v366, %v365
      %v370 = vpack.c.bf16 %v302, %v301
      %v371 = vsel %vm263, 1, 0
      %v372 = vsel %vm264, 1, 0
      %vm373 = vcmp.eq.s32.totalorder %v371, 1
      %vm374 = vcmp.eq.s32.totalorder %v372, 1
      %v375 = vsel %vm373, %v308, %v314
      %v376 = vsel %vm374, %v307, %v315
      %v377 = vpack.c.bf16 %v376, %v375
      %v378 = vsel %vm373, %v333, %v343
      %v379 = vsel %vm374, %v332, %v344
      %v380 = vpack.c.bf16 %v379, %v378
      %v381 = vsel %vm373, %v353, %v358
      %v382 = vsel %vm374, %v352, %v359
      %v383 = vpack.c.bf16 %v382, %v381
      %v385 = vunpack.c.l.b16 %v322
      %v386 = vunpack.c.h.b16 %v322
      %v387 = vpack.c.b16 %v385, %v385
      %v388 = vpack.c.b16 %v386, %v386
      %v390 = vunpack.c.l.b16 %v347
      %v391 = vunpack.c.h.b16 %v347
      %v392 = vpack.c.b16 %v390, %v390
      %v393 = vpack.c.b16 %v391, %v391
      %v394 = vrot.slane %v392, 6
      %v395 = vrot.slane %v393, 6
      %v397 = vunpack.c.l.b16 %v362
      %v398 = vunpack.c.h.b16 %v362
      %v399 = vpack.c.b16 %v397, %v397
      %v400 = vpack.c.b16 %v398, %v398
      %v402 = vunpack.c.l.b16 %v363
      %v403 = vunpack.c.h.b16 %v363
      %v404 = vpack.c.b16 %v402, %v402
      %v405 = vpack.c.b16 %v403, %v403
      %v406 = vrot.slane %v404, 2
      %v407 = vrot.slane %v405, 2
      %v409 = vunpack.c.l.b16 %v369
      %v410 = vunpack.c.h.b16 %v369
      %v411 = vpack.c.b16 %v409, %v409
      %v412 = vpack.c.b16 %v410, %v410
      %v414 = vunpack.c.l.b16 %v370
      %v415 = vunpack.c.h.b16 %v370
      %v416 = vpack.c.b16 %v414, %v414
      %v417 = vpack.c.b16 %v415, %v415
      %v418 = vrot.slane %v416, 6
      %v419 = vrot.slane %v417, 6
      %v421 = vunpack.c.l.b16 %v377
      %v422 = vunpack.c.h.b16 %v377
      %v423 = vpack.c.b16 %v421, %v421
      %v424 = vpack.c.b16 %v422, %v422
      %v426 = vunpack.c.l.b16 %v380
      %v427 = vunpack.c.h.b16 %v380
      %v428 = vpack.c.b16 %v426, %v426
      %v429 = vpack.c.b16 %v427, %v427
      %v430 = vrot.slane %v428, 2
      %v431 = vrot.slane %v429, 2
      %v433 = vunpack.c.l.b16 %v383
      %v434 = vunpack.c.h.b16 %v383
      %v435 = vpack.c.b16 %v433, %v433
      %v436 = vpack.c.b16 %v434, %v434
      %vm437 = vcmask 1041408
      %v440 = vsel %vm437, %v387, %v394
      %v443 = vsel %vm437, %v388, %v395
      %vm444 = vcmask 1043456
      %v446 = vsel %vm444, %v440, %v399
      %v448 = vsel %vm444, %v443, %v400
      %vm449 = vcmask 1045504
      %v451 = vsel %vm449, %v446, %v406
      %v454 = vsel %vm449, %v448, %v407
      %v458 = vsel %vm437, %v411, %v418
      %v461 = vsel %vm437, %v412, %v419
      %v463 = vsel %vm444, %v458, %v423
      %v465 = vsel %vm444, %v461, %v424
      %v467 = vsel %vm449, %v463, %v430
      %v470 = vsel %vm449, %v465, %v431
      %473 = vset.pattern.permute.xlu0 0
      %474 = vperm.xlu0 %473, %v228
      %v475 = vpop.permute.xlu0 %474
      %vm477 = vcmask 293888
      %v479 = vsel %vm477, %v226, 0
      %v482 = vsel %vm437, %v435, 0
      %v485 = vsel %vm437, %v436, 0
      %487 = vmatpush.bf16.msra.mxu0 0
      %488 = vmatpush.bf16.msra.mxu0 0
      %489 = vmatpush.bf16.msra.mxu0 0
      %490 = vmatpush.bf16.msra.mxu0 0
      %491 = vmatpush.bf16.msra.mxu0 0
      %492 = vmatpush.bf16.msra.mxu0 %v482
      %493 = vmatpush.bf16.msra.mxu0 %v467
      %494 = vmatpush.bf16.msra.mxu0 %v451
      %495 = vmatmul.bf16.gmra.mxu0 %v479
      %v496 = vpop.f32.mrf.mxu0
      %v497 = vadd.f32 %v475, %v496
      %v498 = vpop.f32.mrf.mxu0
      %499 = vdwg.mxu0
      %500 = vmatpush.bf16.msra.mxu0 0
      %501 = vmatpush.bf16.msra.mxu0 0
      %502 = vmatpush.bf16.msra.mxu0 0
      %503 = vmatpush.bf16.msra.mxu0 0
      %504 = vmatpush.bf16.msra.mxu0 0
      %505 = vmatpush.bf16.msra.mxu0 %v485
      %506 = vmatpush.bf16.msra.mxu0 %v470
      %507 = vmatpush.bf16.msra.mxu0 %v454
      %508 = vmatmul.bf16.gmra.mxu0 %v479
      %v509 = vpop.f32.mrf.mxu0
      %v510 = vadd.f32 %v475, %v509
      %v511 = vpop.f32.mrf.mxu0
      %512 = vdwg.mxu0
      %v513 = vsel %vm444, %v497, 0.0
      %v514 = vsel %vm444, %v510, 0.0
      %v515 = vadd.f32 %v513, %v514
      %516 = vadd.xlane.f32.xlu0 %v515
      %v517 = vpop.xlane.xlu0 %516
      %v518 = vmul.f32 %v497, %v497
      %v519 = vmul.f32 %v510, %v510
      %v520 = vsel %vm444, %v518, 0.0
      %v521 = vsel %vm444, %v519, 0.0
      %v522 = vadd.f32 %v520, %v521
      %523 = vadd.xlane.f32.xlu0 %v522
      %v524 = vpop.xlane.xlu0 %523
      %v525 = vmul.f32 %v517, 0.00390625
      %v526 = vmul.f32 %v524, 0.00390625
      %v527 = vmul.f32 %v525, %v525
      %v528 = vsub.f32 %v526, %v527
      %v529 = vmax.f32 %v528, 0.0
      %v530 = vsub.f32 %v497, %v525
      %v531 = vsub.f32 %v510, %v525
      %v532 = vadd.f32 %v529, 1e-05
      %v533 = vrsqrt.pop %v532
      %v534 = vmul.f32 %v533, %v532
      %v535 = vmul.f32 %v534, %v533
      %v536 = vmul.f32 0.5, %v535
      %v537 = vsub.f32 1.5, %v536
      %v538 = vmul.f32 %v533, %v537
      %vm539 = vweird.f32 %v532
      %vm540 = vweird.f32 %v533
      %vm541 = vmor %vm539, %vm540
      %v542 = vsel %vm541, %v533, %v538
      %v543 = vmul.f32 %v530, %v542
      %v544 = vmul.f32 %v531, %v542
      %v545 = vmax.f32 %v543, 0.0
      %v546 = vmax.f32 %v544, 0.0
      %547 = vrot.lane.b32.xlu0 %v545, 1
      %v548 = vpop.permute.xlu0 %547
      %549 = vrot.lane.b32.xlu0 %v546, 1
      %v550 = vpop.permute.xlu0 %549
      %v551 = vsel %vm276, %v548, %v550
      %v552 = vsel %vm276, %v550, %v548
      %553 = vrot.lane.b32.xlu0 %v545, 127
      %v554 = vpop.permute.xlu0 %553
      %555 = vrot.lane.b32.xlu0 %v546, 127
      %v556 = vpop.permute.xlu0 %555
      %v557 = vsel %vm288, %v554, %v556
      %v558 = vsel %vm288, %v556, %v554
      %v559 = vsel %vm293, %v557, %v552
      %v560 = vsel %vm294, %v558, %v551
      %v561 = vsel %vm299, %v552, %v557
      %v562 = vsel %vm300, %v551, %v558
      %563 = vrot.lane.b32.xlu0 %v559, 16
      %v564 = vpop.permute.xlu0 %563
      %565 = vrot.lane.b32.xlu0 %v560, 16
      %v566 = vpop.permute.xlu0 %565
      %v567 = vsel %vm261, %v564, %v566
      %v568 = vsel %vm261, %v566, %v564
      %569 = vrot.lane.b32.xlu0 %v559, 112
      %v570 = vpop.permute.xlu0 %569
      %571 = vrot.lane.b32.xlu0 %v560, 112
      %v572 = vpop.permute.xlu0 %571
      %v573 = vsel %vm313, %v570, %v572
      %v574 = vsel %vm313, %v572, %v570
      %v575 = vsel %vm318, %v573, %v568
      %v576 = vsel %vm319, %v574, %v567
      %v577 = vpack.c.bf16 %v576, %v575
      %578 = vrot.lane.b32.xlu0 %v545, 16
      %v579 = vpop.permute.xlu0 %578
      %580 = vrot.lane.b32.xlu0 %v546, 16
      %v581 = vpop.permute.xlu0 %580
      %v582 = vsel %vm261, %v579, %v581
      %v583 = vsel %vm261, %v581, %v579
      %584 = vrot.lane.b32.xlu0 %v545, 112
      %v585 = vpop.permute.xlu0 %584
      %586 = vrot.lane.b32.xlu0 %v546, 112
      %v587 = vpop.permute.xlu0 %586
      %v588 = vsel %vm313, %v585, %v587
      %v589 = vsel %vm313, %v587, %v585
      %v590 = vsel %vm318, %v588, %v583
      %v591 = vsel %vm319, %v589, %v582
      %v592 = vpack.c.bf16 %v591, %v590
      %593 = vrot.lane.b32.xlu0 %v561, 16
      %v594 = vpop.permute.xlu0 %593
      %595 = vrot.lane.b32.xlu0 %v562, 16
      %v596 = vpop.permute.xlu0 %595
      %v597 = vsel %vm261, %v594, %v596
      %v598 = vsel %vm261, %v596, %v594
      %599 = vrot.lane.b32.xlu0 %v561, 112
      %v600 = vpop.permute.xlu0 %599
      %601 = vrot.lane.b32.xlu0 %v562, 112
      %v602 = vpop.permute.xlu0 %601
      %v603 = vsel %vm313, %v600, %v602
      %v604 = vsel %vm313, %v602, %v600
      %v605 = vsel %vm318, %v603, %v598
      %v606 = vsel %vm319, %v604, %v597
      %v607 = vpack.c.bf16 %v606, %v605
      %v608 = vpack.c.bf16 %v560, %v559
      %v609 = vpack.c.bf16 %v546, %v545
      %v610 = vpack.c.bf16 %v562, %v561
      %v611 = vsel %vm373, %v568, %v573
      %v612 = vsel %vm374, %v567, %v574
      %v613 = vpack.c.bf16 %v612, %v611
      %v614 = vsel %vm373, %v583, %v588
      %v615 = vsel %vm374, %v582, %v589
      %v616 = vpack.c.bf16 %v615, %v614
      %v617 = vsel %vm373, %v598, %v603
      %v618 = vsel %vm374, %v597, %v604
      %v619 = vpack.c.bf16 %v618, %v617
      %v621 = vunpack.c.l.b16 %v577
      %v622 = vunpack.c.h.b16 %v577
      %v623 = vpack.c.b16 %v621, %v621
      %v624 = vpack.c.b16 %v622, %v622
      %v626 = vunpack.c.l.b16 %v592
      %v627 = vunpack.c.h.b16 %v592
      %v628 = vpack.c.b16 %v626, %v626
      %v629 = vpack.c.b16 %v627, %v627
      %v630 = vrot.slane %v628, 6
      %v631 = vrot.slane %v629, 6
      %v633 = vunpack.c.l.b16 %v607
      %v634 = vunpack.c.h.b16 %v607
      %v635 = vpack.c.b16 %v633, %v633
      %v636 = vpack.c.b16 %v634, %v634
      %v638 = vunpack.c.l.b16 %v608
      %v639 = vunpack.c.h.b16 %v608
      %v640 = vpack.c.b16 %v638, %v638
      %v641 = vpack.c.b16 %v639, %v639
      %v642 = vrot.slane %v640, 2
      %v643 = vrot.slane %v641, 2
      %v645 = vunpack.c.l.b16 %v609
      %v646 = vunpack.c.h.b16 %v609
      %v647 = vpack.c.b16 %v645, %v645
      %v648 = vpack.c.b16 %v646, %v646
      %v650 = vunpack.c.l.b16 %v610
      %v651 = vunpack.c.h.b16 %v610
      %v652 = vpack.c.b16 %v650, %v650
      %v653 = vpack.c.b16 %v651, %v651
      %v654 = vrot.slane %v652, 6
      %v655 = vrot.slane %v653, 6
      %v657 = vunpack.c.l.b16 %v613
      %v658 = vunpack.c.h.b16 %v613
      %v659 = vpack.c.b16 %v657, %v657
      %v660 = vpack.c.b16 %v658, %v658
      %v662 = vunpack.c.l.b16 %v616
      %v663 = vunpack.c.h.b16 %v616
      %v664 = vpack.c.b16 %v662, %v662
      %v665 = vpack.c.b16 %v663, %v663
      %v666 = vrot.slane %v664, 2
      %v667 = vrot.slane %v665, 2
      %v669 = vunpack.c.l.b16 %v619
      %v670 = vunpack.c.h.b16 %v619
      %v671 = vpack.c.b16 %v669, %v669
      %v672 = vpack.c.b16 %v670, %v670
      %v675 = vsel %vm437, %v623, %v630
      %v678 = vsel %vm437, %v624, %v631
      %v680 = vsel %vm444, %v675, %v635
      %v682 = vsel %vm444, %v678, %v636
      %v684 = vsel %vm449, %v680, %v642
      %v687 = vsel %vm449, %v682, %v643
      %v691 = vsel %vm437, %v647, %v654
      %v694 = vsel %vm437, %v648, %v655
      %v696 = vsel %vm444, %v691, %v659
      %v698 = vsel %vm444, %v694, %v660
      %v700 = vsel %vm449, %v696, %v666
      %v703 = vsel %vm449, %v698, %v667
      %706 = vset.pattern.permute.xlu0 0
      %707 = vperm.xlu0 %706, %v229
      %v708 = vpop.permute.xlu0 %707
      %v711 = vsel %vm477, %v227, 0
      %v714 = vsel %vm437, %v671, 0
      %v717 = vsel %vm437, %v672, 0
      %719 = vmatpush.bf16.msra.mxu0 0
      %720 = vmatpush.bf16.msra.mxu0 0
      %721 = vmatpush.bf16.msra.mxu0 0
      %722 = vmatpush.bf16.msra.mxu0 0
      %723 = vmatpush.bf16.msra.mxu0 0
      %724 = vmatpush.bf16.msra.mxu0 %v714
      %725 = vmatpush.bf16.msra.mxu0 %v700
      %726 = vmatpush.bf16.msra.mxu0 %v684
      %727 = vmatmul.bf16.gmra.mxu0 %v711
      %v728 = vpop.f32.mrf.mxu0
      %v729 = vadd.f32 %v708, %v728
      %v730 = vpop.f32.mrf.mxu0
      %731 = vdwg.mxu0
      %732 = vmatpush.bf16.msra.mxu0 0
      %733 = vmatpush.bf16.msra.mxu0 0
      %734 = vmatpush.bf16.msra.mxu0 0
      %735 = vmatpush.bf16.msra.mxu0 0
      %736 = vmatpush.bf16.msra.mxu0 0
      %737 = vmatpush.bf16.msra.mxu0 %v717
      %738 = vmatpush.bf16.msra.mxu0 %v703
      %739 = vmatpush.bf16.msra.mxu0 %v687
      %740 = vmatmul.bf16.gmra.mxu0 %v711
      %v741 = vpop.f32.mrf.mxu0
      %v742 = vadd.f32 %v708, %v741
      %v743 = vpop.f32.mrf.mxu0
      %744 = vdwg.mxu0
      %v745 = vsel %vm444, %v729, 0.0
      %v746 = vsel %vm444, %v742, 0.0
      %v747 = vadd.f32 %v745, %v746
      %748 = vadd.xlane.f32.xlu0 %v747
      %v749 = vpop.xlane.xlu0 %748
      %v750 = vmul.f32 %v729, %v729
      %v751 = vmul.f32 %v742, %v742
      %v752 = vsel %vm444, %v750, 0.0
      %v753 = vsel %vm444, %v751, 0.0
      %v754 = vadd.f32 %v752, %v753
      %755 = vadd.xlane.f32.xlu0 %v754
      %v756 = vpop.xlane.xlu0 %755
      %v757 = vmul.f32 %v749, 0.00390625
      %v758 = vmul.f32 %v756, 0.00390625
      %v759 = vmul.f32 %v757, %v757
      %v760 = vsub.f32 %v758, %v759
      %v761 = vmax.f32 %v760, 0.0
      %v762 = vsub.f32 %v729, %v757
      %v763 = vsub.f32 %v742, %v757
      %v764 = vadd.f32 %v761, 1e-05
      %v765 = vrsqrt.pop %v764
      %v766 = vmul.f32 %v765, %v764
      %v767 = vmul.f32 %v766, %v765
      %v768 = vmul.f32 0.5, %v767
      %v769 = vsub.f32 1.5, %v768
      %v770 = vmul.f32 %v765, %v769
      %vm771 = vweird.f32 %v764
      %vm772 = vweird.f32 %v765
      %vm773 = vmor %vm771, %vm772
      %v774 = vsel %vm773, %v765, %v770
      %v775 = vmul.f32 %v762, %v774
      %v776 = vmul.f32 %v763, %v774
      %v779 = vrot.slane %v776, 4
      %v780 = vsel %vm444, %v775, %v779
      %v782 = vadd.f32 %v265, %v780
      %783 = vst [vmem:[%s224] sm:$0xff] %v782
      %p784 = scmp.lt.s32.totalorder %s16, 1
      %s785 = scalar_select %p784, %s16, 1
      %s786 = smul.addr %s785, 2
      %s787 = smul.addr %s786, 4
      %s788 = scalar_lea.vmem %s5, %s787
      // Predicated region
      $region41: #{resnet_block_nchw.1} parent=39 // pred_check
        %p789 = pneg %p144
      $region42: #{resnet_block_nchw.1} parent=39 // pred_check_branch
        %791 = sbr.rel (%p789) target = $region44
      $region43: #{resnet_block_nchw.1} parent=39 // pred_region
        _
      $region44: #{resnet_block_nchw.1} parent=39 // pred_fallthru
        _
    $region40: #{resnet_block_nchw.1} parent=5 // pred_fallthru
      _
    %p792 = scmp.le.s32.totalorder 2, %s11
    // Predicated region
    $region45: #{resnet_block_nchw.1} parent=5 // pred_check
      %p793 = pneg %p792
    $region46: #{resnet_block_nchw.1} parent=5 // pred_check_branch
      %795 = sbr.rel (%p793) target = $region48
    $region47: #{resnet_block_nchw.1} parent=5 // pred_region
      %s796 = ssub.s32 %s11, 2
      // Predicated region
      $region49: #{resnet_block_nchw.1} parent=47 // pred_check
        %p797 = pneg %p150
      $region50: #{resnet_block_nchw.1} parent=47 // pred_check_branch
        %799 = sbr.rel (%p797) target = $region52
      $region51: #{resnet_block_nchw.1} parent=47 // pred_region
        %p800 = scmp.lt.s32.totalorder %s17, 1
        %s801 = scalar_select %p800, %s17, 1
        %s802 = smul.addr %s801, 2
        %s803 = smul.addr %s802, 4
        %s804 = scalar_lea.vmem %s5, %s803
      $region52: #{resnet_block_nchw.1} parent=47 // pred_fallthru
        _
    $region48: #{resnet_block_nchw.1} parent=5 // pred_fallthru
      _
  $region6: #{resnet_block_nchw.1} parent=0 // loop_footer
    %s15 = sadd.s32 1, %s11
  $region7: #{resnet_block_nchw.1} parent=0 // loop_footer_branch
    %10 = sbr.rel target = $region3
  $region8: #{resnet_block_nchw.1} parent=0 // loop_exit
    _

</llo_original>
